<compile_context>
chip_gen: v5e
topology: v5e:2x2
jax: 0.10.0
libtpu: 0.0.40
codegen_flags: <defaults>
</compile_context>

<pallas_src>
import jax
import jax.numpy as jnp
from jax.experimental import pallas as pl
from jax.experimental.pallas import tpu as pltpu


_KH = 3  # 3x3 convolutions (conv_net spec)


# ----------------------------------------------------------------------------
# Fused kernel: conv1 -> relu1 -> conv2 -> relu2 -> fc, all VMEM-resident.
# One grid step = one batch sample (parallel across TensorCores on v7x).
# ----------------------------------------------------------------------------
def _fused_convnet_kernel(xpad_ref, w1_ref, b1_ref, w2_ref, b2_ref,
                          wfc_ref, bfc_ref,
                          conv1_ref, conv2_ref, fc_ref,
                          pad2_ref):
    H = conv1_ref.shape[1]

    # ---- conv1 (+ bias): one banded GEMM -------------------------------------
    # LHS = lane-concat of the KH row-shifted slabs of the H-padded input
    # ([H, KH*lanes]); the banded weight is K-stacked host-side, so the whole
    # 3x3 conv (W-taps folded into the band structure) is a single MXU dot.
    kh1 = xpad_ref.shape[1] - H + 1
    lhs1 = jnp.concatenate(
        [xpad_ref[0, kh:kh + H, :] for kh in range(kh1)], axis=-1)
    conv1 = jnp.dot(lhs1, w1_ref[...],
                    preferred_element_type=jnp.float32) + b1_ref[...]
    conv1_ref[...] = conv1.reshape(conv1_ref.shape)
    relu1 = jnp.maximum(conv1, 0.0)

    # ---- zero-pad relu1 in H inside VMEM (only the two halo rows are zeroed) -
    lanes1 = pad2_ref.shape[1]
    zrow = jnp.zeros((1, lanes1), jnp.float32)
    pad2_ref[0:1, :] = zrow
    pad2_ref[H + 1:H + 2, :] = zrow
    pad2_ref[1:H + 1, :] = relu1

    # ---- conv2 (+ bias): one banded GEMM -------------------------------------
    kh2 = pad2_ref.shape[0] - H + 1
    lhs2 = jnp.concatenate(
        [pad2_ref[kh:kh + H, :] for kh in range(kh2)], axis=-1)
    conv2 = jnp.dot(lhs2, w2_ref[...],
                    preferred_element_type=jnp.float32) + b2_ref[...]
    conv2_ref[...] = conv2.reshape(conv2_ref.shape)

    # ---- fc: single K = H*lanes contraction ----------------------------------
    # Flatten (h, lane) into one lane-dense K axis by lane-concatenating the H
    # rows of the VMEM-resident conv2 block (ReLU fused per row), then do ONE
    # MXU dot against the pre-flattened fc weight [H*lanes, FC_OUT].
    flat = jnp.concatenate(
        [jnp.maximum(conv2_ref[0, h:h + 1, :], 0.0) for h in range(H)], axis=-1)
    fc = jnp.dot(flat, wfc_ref[...],
                 preferred_element_type=jnp.float32) + bfc_ref[...]
    fc_ref[...] = fc.reshape(fc_ref.shape)


# ----------------------------------------------------------------------------
# One-time (init-time) weight preparation — hoisted out of the per-call path.
# ----------------------------------------------------------------------------
def _banded_conv_weights(w, W, c_in_pad=None):
    """PyTorch OIHW conv weight -> K-stacked banded GEMM matrix.

    Returns [KH * W * CP, W * OC] where block kh has
    M[kh][w_in*CP + c, w_out*OC + o] = w[o, c, kh, kw] when
    w_in == w_out + kw - KW//2 (zero otherwise), so a single GEMM against the
    lane-concatenated row-shifted slabs applies the full 3x3 conv with 'same'
    W-padding folded into the band structure.  Input channels can be padded to
    CP with zero rows (lane alignment).
    """
    OC, C, KH, KW = w.shape
    CP = C if c_in_pad is None else c_in_pad
    mats = []
    for kh in range(KH):
        m4 = jnp.zeros((W, CP, W, OC), jnp.float32)
        for kw in range(KW):
            band = jnp.eye(W, k=(KW // 2) - kw, dtype=jnp.float32)  # [w_in, w_out]
            tap = w[:, :, kh, kw].T.astype(jnp.float32)             # [C, OC]
            tap = jnp.pad(tap, ((0, CP - C), (0, 0)))                # [CP, OC]
            m4 = m4 + band[:, None, :, None] * tap[None, :, None, :]
        mats.append(m4.reshape(W * CP, W * OC))
    return jnp.concatenate(mats, axis=0)  # [KH*W*CP, W*OC]


def prepare_kernel_params(params, H, W):
    """Build all kernel-ready weights ONCE (not in the per-forward hot path)."""
    C = params["conv1_w"].shape[1]
    OC1 = params["conv1_w"].shape[0]
    OC2 = params["conv2_w"].shape[0]
    FC_OUT = params["fc_w"].shape[0]

    # pad conv1 input channels so W*CP is a full multiple of 128 lanes
    cp1 = max(C, -(-128 // W))

    w1s = _banded_conv_weights(params["conv1_w"], W, c_in_pad=cp1)  # [3*W*CP, W*OC1]
    w2s = _banded_conv_weights(params["conv2_w"], W)                # [3*W*OC1, W*OC2]
    b1 = jnp.tile(params["conv1_b"].astype(jnp.float32), W).reshape(1, W * OC1)
    b2 = jnp.tile(params["conv2_b"].astype(jnp.float32), W).reshape(1, W * OC2)

    # fc weight: PyTorch flatten order is (c, h, w); permute to (h, w, c, o)
    # and flatten to [H*W*OC2, FC_OUT] so the kernel's lane-concatenated
    # [1, H*W*OC2] slab contracts it in a single dot.
    wfc = params["fc_w"].reshape(FC_OUT, OC2, H, W)
    wfc = jnp.transpose(wfc, (2, 3, 1, 0)).reshape(H * W * OC2, FC_OUT)
    wfc = wfc.astype(jnp.float32)
    bfc = params["fc_b"].astype(jnp.float32).reshape(1, FC_OUT)

    return {"w1s": w1s, "b1": b1, "w2s": w2s, "b2": b2, "wfc": wfc, "bfc": bfc}


# ----------------------------------------------------------------------------
# Forward: AllSequential.forward -> (fc_out, {module_name: activation})
# ----------------------------------------------------------------------------
def all_sequential_forward(kparams, x):
    N, C, H, W = x.shape
    CP1 = kparams["w1s"].shape[0] // (_KH * W)
    OC1 = kparams["b1"].shape[1] // W
    OC2 = kparams["b2"].shape[1] // W
    FC_OUT = kparams["bfc"].shape[1]

    # input NCHW -> channel-last, H zero-padded by 1, C zero-padded to CP1,
    # (W, C) collapsed into a 128-wide lane dim.
    x_cl = jnp.transpose(x, (0, 2, 3, 1))                           # [N, H, W, C]
    xpad = jnp.pad(x_cl, ((0, 0), (1, 1), (0, 0), (0, CP1 - C)))
    xpad = xpad.reshape(N, H + 2, W * CP1)

    out_shape = (
        jax.ShapeDtypeStruct((N, H, W * OC1), jnp.float32),   # conv1 (pre-relu)
        jax.ShapeDtypeStruct((N, H, W * OC2), jnp.float32),   # conv2 (pre-relu)
        jax.ShapeDtypeStruct((N, 1, FC_OUT), jnp.float32),    # fc
    )

    def _bcast(shape):  # weight blocks: constant index map -> DMA'd once
        return pl.BlockSpec(shape, lambda n: (0,) * len(shape))

    grid_spec = pltpu.PrefetchScalarGridSpec(
        num_scalar_prefetch=0,
        grid=(N,),
        in_specs=[
            pl.BlockSpec((1, H + 2, W * CP1), lambda n: (n, 0, 0)),
            _bcast(kparams["w1s"].shape), _bcast(kparams["b1"].shape),
            _bcast(kparams["w2s"].shape), _bcast(kparams["b2"].shape),
            _bcast(kparams["wfc"].shape), _bcast(kparams["bfc"].shape),
        ],
        out_specs=(
            pl.BlockSpec((1, H, W * OC1), lambda n: (n, 0, 0)),
            pl.BlockSpec((1, H, W * OC2), lambda n: (n, 0, 0)),
            pl.BlockSpec((1, 1, FC_OUT), lambda n: (n, 0, 0)),
        ),
        scratch_shapes=[pltpu.VMEM((H + 2, W * OC1), jnp.float32)],
    )

    conv1_l, conv2_l, fc3 = pl.pallas_call(
        _fused_convnet_kernel,
        out_shape=out_shape,
        grid_spec=grid_spec,
        compiler_params=pltpu.CompilerParams(
            dimension_semantics=("parallel",)),   # v7x: one sample per core
    )(xpad, kparams["w1s"], kparams["b1"], kparams["w2s"], kparams["b2"],
      kparams["wfc"], kparams["bfc"])

    fc_out = fc3.reshape(N, FC_OUT)

    # ---- record activations in the PyTorch (NCHW) convention -----------------
    # relu1/relu2 are NOT kernel outputs: XLA fuses the max into the transpose.
    def to_nchw(a, oc):
        return a.reshape(N, H, W, oc).transpose(0, 3, 1, 2)

    conv1_nchw = to_nchw(conv1_l, OC1)
    conv2_nchw = to_nchw(conv2_l, OC2)
    relu1_nchw = jnp.maximum(conv1_nchw, 0.0)
    relu2_nchw = jnp.maximum(conv2_nchw, 0.0)

    activations = {
        "conv1": conv1_nchw,
        "relu1": relu1_nchw,
        "conv2": conv2_nchw,
        "relu2": relu2_nchw,
        "flatten": relu2_nchw.reshape(N, -1),   # pure reshape
        "fc": fc_out,
    }
    return fc_out, activations


# ----------------------------------------------------------------------------
# Deterministic parameters + pure-JAX reference (correctness sanity check)
# ----------------------------------------------------------------------------
def init_params(key):
    k1, k2, k3, k4, k5, k6 = jax.random.split(key, 6)
    return {
        "conv1_w": jax.random.normal(k1, (8, 4, 3, 3), jnp.float32) * 0.1,
        "conv1_b": jax.random.normal(k2, (8,), jnp.float32) * 0.1,
        "conv2_w": jax.random.normal(k3, (8, 8, 3, 3), jnp.float32) * 0.1,
        "conv2_b": jax.random.normal(k4, (8,), jnp.float32) * 0.1,
        "fc_w": jax.random.normal(k5, (10, 8 * 16 * 16), jnp.float32) * 0.02,
        "fc_b": jax.random.normal(k6, (10,), jnp.float32) * 0.02,
    }


def _ref_forward(params, x):
    def conv(x, w, b):
        y = jax.lax.conv_general_dilated(
            x, w, window_strides=(1, 1), padding=((1, 1), (1, 1)),
            dimension_numbers=("NCHW", "OIHW", "NCHW"))
        return y + b.reshape(1, -1, 1, 1)

    acts = {}
    x = conv(x, params["conv1_w"], params["conv1_b"]); acts["conv1"] = x
    x = jnp.maximum(x, 0.0); acts["relu1"] = x
    x = conv(x, params["conv2_w"], params["conv2_b"]); acts["conv2"] = x
    x = jnp.maximum(x, 0.0); acts["relu2"] = x
    x = x.reshape(x.shape[0], -1); acts["flatten"] = x
    x = x @ params["fc_w"].T + params["fc_b"]; acts["fc"] = x
    return x, acts


if __name__ == "__main__":
    key = jax.random.PRNGKey(0)
    kp, kx = jax.random.split(key)
    params = init_params(kp)

    # input: NCHW, batch=2, channels=4, spatial 16x16
    x = jax.random.normal(kx, (2, 4, 16, 16), jnp.float32)

    # one-time weight prep (out of the per-call hot path)
    kparams = prepare_kernel_params(params, H=16, W=16)
    kparams = jax.tree_util.tree_map(jax.block_until_ready, kparams)

    fwd = jax.jit(all_sequential_forward)
    out, activations = fwd(kparams, x)
    out = jax.block_until_ready(out)
    activations = jax.tree_util.tree_map(jax.block_until_ready, activations)

    ref_out, ref_acts = _ref_forward(params, x)
    assert out.shape == (2, 10)
    assert jnp.allclose(out, ref_out, rtol=1e-4, atol=1e-4)
    for name in ["conv1", "relu1", "conv2", "relu2", "flatten", "fc"]:
        assert jnp.allclose(activations[name], ref_acts[name],
                            rtol=1e-4, atol=1e-4), name

    print("KERNEL_OK")
</pallas_src>

<mosaic_0001>
module attributes {stable_mosaic.version = 11 : i64} {
  func.func @_fused_convnet_kernel(%arg0: i32, %arg1: memref<1x18x128xf32, #tpu.memory_space<vmem>>, %arg2: memref<384x128xf32, #tpu.memory_space<vmem>>, %arg3: memref<1x128xf32, #tpu.memory_space<vmem>>, %arg4: memref<384x128xf32, #tpu.memory_space<vmem>>, %arg5: memref<1x128xf32, #tpu.memory_space<vmem>>, %arg6: memref<2048x10xf32, #tpu.memory_space<vmem>>, %arg7: memref<1x10xf32, #tpu.memory_space<vmem>>, %arg8: memref<1x16x128xf32, #tpu.memory_space<vmem>>, %arg9: memref<1x16x128xf32, #tpu.memory_space<vmem>>, %arg10: memref<1x1x10xf32, #tpu.memory_space<vmem>>, %arg11: memref<18x128xf32, #tpu.memory_space<vmem>>) attributes {dimension_semantics = [#tpu.dimension_semantics<parallel>], iteration_bounds = array<i64: 2>, scalar_prefetch = 0 : i64, scratch_operands = 1 : i64, tpu.core_type = #tpu.core_type<tc>, window_params = [{transform_indices = @transform_0, window_bounds = array<i64: 1, 18, 128>}, {pipeline_mode = #tpu.pipeline_mode<synchronous>, transform_indices = @transform_1, window_bounds = array<i64: 384, 128>}, {pipeline_mode = #tpu.pipeline_mode<synchronous>, transform_indices = @transform_2, window_bounds = array<i64: 1, 128>}, {pipeline_mode = #tpu.pipeline_mode<synchronous>, transform_indices = @transform_3, window_bounds = array<i64: 384, 128>}, {pipeline_mode = #tpu.pipeline_mode<synchronous>, transform_indices = @transform_4, window_bounds = array<i64: 1, 128>}, {pipeline_mode = #tpu.pipeline_mode<synchronous>, transform_indices = @transform_5, window_bounds = array<i64: 2048, 10>}, {pipeline_mode = #tpu.pipeline_mode<synchronous>, transform_indices = @transform_6, window_bounds = array<i64: 1, 10>}, {transform_indices = @transform_7, window_bounds = array<i64: 1, 16, 128>}, {transform_indices = @transform_8, window_bounds = array<i64: 1, 16, 128>}, {transform_indices = @transform_9, window_bounds = array<i64: 1, 1, 10>}]} {
    %c0 = arith.constant 0 : index
    %c0_0 = arith.constant 0 : index
    %c0_1 = arith.constant 0 : index
    %0 = vector.load %arg1[%c0, %c0_0, %c0_1] : memref<1x18x128xf32, #tpu.memory_space<vmem>>, vector<1x16x128xf32>
    %1 = vector.shape_cast %0 : vector<1x16x128xf32> to vector<16x128xf32>
    %c0_2 = arith.constant 0 : index
    %c1 = arith.constant 1 : index
    %c0_3 = arith.constant 0 : index
    %2 = vector.load %arg1[%c0_2, %c1, %c0_3] : memref<1x18x128xf32, #tpu.memory_space<vmem>>, vector<1x16x128xf32>
    %3 = vector.shape_cast %2 : vector<1x16x128xf32> to vector<16x128xf32>
    %c0_4 = arith.constant 0 : index
    %c2 = arith.constant 2 : index
    %c0_5 = arith.constant 0 : index
    %4 = vector.load %arg1[%c0_4, %c2, %c0_5] : memref<1x18x128xf32, #tpu.memory_space<vmem>>, vector<1x16x128xf32>
    %5 = vector.shape_cast %4 : vector<1x16x128xf32> to vector<16x128xf32>
    %6 = tpu.concatenate %1, %3, %5 in 1 : vector<16x128xf32>, vector<16x128xf32>, vector<16x128xf32> -> vector<16x384xf32>
    %c0_6 = arith.constant 0 : index
    %c0_7 = arith.constant 0 : index
    %7 = vector.load %arg2[%c0_6, %c0_7] : memref<384x128xf32, #tpu.memory_space<vmem>>, vector<384x128xf32>
    %cst = arith.constant dense<0.000000e+00> : vector<16x128xf32>
    %8 = tpu.matmul %6, %7, %cst {dimension_numbers = #tpu.dot_dimension_numbers<[1], [0], [0], [1], [0, 0, 1, 1], [], []>} : vector<16x384xf32>, vector<384x128xf32>, vector<16x128xf32> -> vector<16x128xf32>
    %c0_8 = arith.constant 0 : index
    %c0_9 = arith.constant 0 : index
    %9 = vector.load %arg3[%c0_8, %c0_9] : memref<1x128xf32, #tpu.memory_space<vmem>>, vector<1x128xf32>
    %10 = vector.broadcast %9 : vector<1x128xf32> to vector<16x128xf32>
    %11 = arith.addf %8, %10 : vector<16x128xf32>
    %12 = vector.shape_cast %11 : vector<16x128xf32> to vector<1x16x128xf32>
    %c0_10 = arith.constant 0 : index
    %c0_11 = arith.constant 0 : index
    %c0_12 = arith.constant 0 : index
    %13 = vector.load %arg8[%c0_10, %c0_11, %c0_12] : memref<1x16x128xf32, #tpu.memory_space<vmem>>, vector<1x16x128xf32>
    tpu.vector_store %arg8[%c0_10, %c0_11, %c0_12], %12 {strides = array<i32>} : memref<1x16x128xf32, #tpu.memory_space<vmem>>, vector<1x16x128xf32>,
    %cst_13 = arith.constant 0.000000e+00 : f32
    %14 = vector.broadcast %cst_13 : f32 to vector<16x128xf32>
    %15 = arith.maximumf %11, %14 : vector<16x128xf32>
    %cst_14 = arith.constant 0.000000e+00 : f32
    %16 = vector.broadcast %cst_14 : f32 to vector<1x128xf32>
    %c0_15 = arith.constant 0 : index
    %c0_16 = arith.constant 0 : index
    %17 = vector.load %arg11[%c0_15, %c0_16] : memref<18x128xf32, #tpu.memory_space<vmem>>, vector<1x128xf32>
    tpu.vector_store %arg11[%c0_15, %c0_16], %16 {strides = array<i32>} : memref<18x128xf32, #tpu.memory_space<vmem>>, vector<1x128xf32>,
    %c17 = arith.constant 17 : index
    %c0_17 = arith.constant 0 : index
    %18 = vector.load %arg11[%c17, %c0_17] : memref<18x128xf32, #tpu.memory_space<vmem>>, vector<1x128xf32>
    tpu.vector_store %arg11[%c17, %c0_17], %16 {strides = array<i32>} : memref<18x128xf32, #tpu.memory_space<vmem>>, vector<1x128xf32>,
    %c1_18 = arith.constant 1 : index
    %c0_19 = arith.constant 0 : index
    %19 = vector.load %arg11[%c1_18, %c0_19] : memref<18x128xf32, #tpu.memory_space<vmem>>, vector<16x128xf32>
    tpu.vector_store %arg11[%c1_18, %c0_19], %15 {strides = array<i32>} : memref<18x128xf32, #tpu.memory_space<vmem>>, vector<16x128xf32>,
    %c0_20 = arith.constant 0 : index
    %c0_21 = arith.constant 0 : index
    %20 = vector.load %arg11[%c0_20, %c0_21] : memref<18x128xf32, #tpu.memory_space<vmem>>, vector<16x128xf32>
    %c1_22 = arith.constant 1 : index
    %c0_23 = arith.constant 0 : index
    %21 = vector.load %arg11[%c1_22, %c0_23] : memref<18x128xf32, #tpu.memory_space<vmem>>, vector<16x128xf32>
    %c2_24 = arith.constant 2 : index
    %c0_25 = arith.constant 0 : index
    %22 = vector.load %arg11[%c2_24, %c0_25] : memref<18x128xf32, #tpu.memory_space<vmem>>, vector<16x128xf32>
    %23 = tpu.concatenate %20, %21, %22 in 1 : vector<16x128xf32>, vector<16x128xf32>, vector<16x128xf32> -> vector<16x384xf32>
    %c0_26 = arith.constant 0 : index
    %c0_27 = arith.constant 0 : index
    %24 = vector.load %arg4[%c0_26, %c0_27] : memref<384x128xf32, #tpu.memory_space<vmem>>, vector<384x128xf32>
    %cst_28 = arith.constant dense<0.000000e+00> : vector<16x128xf32>
    %25 = tpu.matmul %23, %24, %cst_28 {dimension_numbers = #tpu.dot_dimension_numbers<[1], [0], [0], [1], [0, 0, 1, 1], [], []>} : vector<16x384xf32>, vector<384x128xf32>, vector<16x128xf32> -> vector<16x128xf32>
    %c0_29 = arith.constant 0 : index
    %c0_30 = arith.constant 0 : index
    %26 = vector.load %arg5[%c0_29, %c0_30] : memref<1x128xf32, #tpu.memory_space<vmem>>, vector<1x128xf32>
    %27 = vector.broadcast %26 : vector<1x128xf32> to vector<16x128xf32>
    %28 = arith.addf %25, %27 : vector<16x128xf32>
    %29 = vector.shape_cast %28 : vector<16x128xf32> to vector<1x16x128xf32>
    %c0_31 = arith.constant 0 : index
    %c0_32 = arith.constant 0 : index
    %c0_33 = arith.constant 0 : index
    %30 = vector.load %arg9[%c0_31, %c0_32, %c0_33] : memref<1x16x128xf32, #tpu.memory_space<vmem>>, vector<1x16x128xf32>
    tpu.vector_store %arg9[%c0_31, %c0_32, %c0_33], %29 {strides = array<i32>} : memref<1x16x128xf32, #tpu.memory_space<vmem>>, vector<1x16x128xf32>,
    %c0_34 = arith.constant 0 : index
    %c0_35 = arith.constant 0 : index
    %c0_36 = arith.constant 0 : index
    %31 = vector.load %arg9[%c0_34, %c0_35, %c0_36] : memref<1x16x128xf32, #tpu.memory_space<vmem>>, vector<1x1x128xf32>
    %32 = vector.shape_cast %31 : vector<1x1x128xf32> to vector<1x128xf32>
    %cst_37 = arith.constant 0.000000e+00 : f32
    %33 = vector.broadcast %cst_37 : f32 to vector<1x128xf32>
    %34 = arith.maximumf %32, %33 : vector<1x128xf32>
    %c0_38 = arith.constant 0 : index
    %c1_39 = arith.constant 1 : index
    %c0_40 = arith.constant 0 : index
    %35 = vector.load %arg9[%c0_38, %c1_39, %c0_40] : memref<1x16x128xf32, #tpu.memory_space<vmem>>, vector<1x1x128xf32>
    %36 = vector.shape_cast %35 : vector<1x1x128xf32> to vector<1x128xf32>
    %cst_41 = arith.constant 0.000000e+00 : f32
    %37 = vector.broadcast %cst_41 : f32 to vector<1x128xf32>
    %38 = arith.maximumf %36, %37 : vector<1x128xf32>
    %c0_42 = arith.constant 0 : index
    %c2_43 = arith.constant 2 : index
    %c0_44 = arith.constant 0 : index
    %39 = vector.load %arg9[%c0_42, %c2_43, %c0_44] : memref<1x16x128xf32, #tpu.memory_space<vmem>>, vector<1x1x128xf32>
    %40 = vector.shape_cast %39 : vector<1x1x128xf32> to vector<1x128xf32>
    %cst_45 = arith.constant 0.000000e+00 : f32
    %41 = vector.broadcast %cst_45 : f32 to vector<1x128xf32>
    %42 = arith.maximumf %40, %41 : vector<1x128xf32>
    %c0_46 = arith.constant 0 : index
    %c3 = arith.constant 3 : index
    %c0_47 = arith.constant 0 : index
    %43 = vector.load %arg9[%c0_46, %c3, %c0_47] : memref<1x16x128xf32, #tpu.memory_space<vmem>>, vector<1x1x128xf32>
    %44 = vector.shape_cast %43 : vector<1x1x128xf32> to vector<1x128xf32>
    %cst_48 = arith.constant 0.000000e+00 : f32
    %45 = vector.broadcast %cst_48 : f32 to vector<1x128xf32>
    %46 = arith.maximumf %44, %45 : vector<1x128xf32>
    %c0_49 = arith.constant 0 : index
    %c4 = arith.constant 4 : index
    %c0_50 = arith.constant 0 : index
    %47 = vector.load %arg9[%c0_49, %c4, %c0_50] : memref<1x16x128xf32, #tpu.memory_space<vmem>>, vector<1x1x128xf32>
    %48 = vector.shape_cast %47 : vector<1x1x128xf32> to vector<1x128xf32>
    %cst_51 = arith.constant 0.000000e+00 : f32
    %49 = vector.broadcast %cst_51 : f32 to vector<1x128xf32>
    %50 = arith.maximumf %48, %49 : vector<1x128xf32>
    %c0_52 = arith.constant 0 : index
    %c5 = arith.constant 5 : index
    %c0_53 = arith.constant 0 : index
    %51 = vector.load %arg9[%c0_52, %c5, %c0_53] : memref<1x16x128xf32, #tpu.memory_space<vmem>>, vector<1x1x128xf32>
    %52 = vector.shape_cast %51 : vector<1x1x128xf32> to vector<1x128xf32>
    %cst_54 = arith.constant 0.000000e+00 : f32
    %53 = vector.broadcast %cst_54 : f32 to vector<1x128xf32>
    %54 = arith.maximumf %52, %53 : vector<1x128xf32>
    %c0_55 = arith.constant 0 : index
    %c6 = arith.constant 6 : index
    %c0_56 = arith.constant 0 : index
    %55 = vector.load %arg9[%c0_55, %c6, %c0_56] : memref<1x16x128xf32, #tpu.memory_space<vmem>>, vector<1x1x128xf32>
    %56 = vector.shape_cast %55 : vector<1x1x128xf32> to vector<1x128xf32>
    %cst_57 = arith.constant 0.000000e+00 : f32
    %57 = vector.broadcast %cst_57 : f32 to vector<1x128xf32>
    %58 = arith.maximumf %56, %57 : vector<1x128xf32>
    %c0_58 = arith.constant 0 : index
    %c7 = arith.constant 7 : index
    %c0_59 = arith.constant 0 : index
    %59 = vector.load %arg9[%c0_58, %c7, %c0_59] : memref<1x16x128xf32, #tpu.memory_space<vmem>>, vector<1x1x128xf32>
    %60 = vector.shape_cast %59 : vector<1x1x128xf32> to vector<1x128xf32>
    %cst_60 = arith.constant 0.000000e+00 : f32
    %61 = vector.broadcast %cst_60 : f32 to vector<1x128xf32>
    %62 = arith.maximumf %60, %61 : vector<1x128xf32>
    %c0_61 = arith.constant 0 : index
    %c8 = arith.constant 8 : index
    %c0_62 = arith.constant 0 : index
    %63 = vector.load %arg9[%c0_61, %c8, %c0_62] : memref<1x16x128xf32, #tpu.memory_space<vmem>>, vector<1x1x128xf32>
    %64 = vector.shape_cast %63 : vector<1x1x128xf32> to vector<1x128xf32>
    %cst_63 = arith.constant 0.000000e+00 : f32
    %65 = vector.broadcast %cst_63 : f32 to vector<1x128xf32>
    %66 = arith.maximumf %64, %65 : vector<1x128xf32>
    %c0_64 = arith.constant 0 : index
    %c9 = arith.constant 9 : index
    %c0_65 = arith.constant 0 : index
    %67 = vector.load %arg9[%c0_64, %c9, %c0_65] : memref<1x16x128xf32, #tpu.memory_space<vmem>>, vector<1x1x128xf32>
    %68 = vector.shape_cast %67 : vector<1x1x128xf32> to vector<1x128xf32>
    %cst_66 = arith.constant 0.000000e+00 : f32
    %69 = vector.broadcast %cst_66 : f32 to vector<1x128xf32>
    %70 = arith.maximumf %68, %69 : vector<1x128xf32>
    %c0_67 = arith.constant 0 : index
    %c10 = arith.constant 10 : index
    %c0_68 = arith.constant 0 : index
    %71 = vector.load %arg9[%c0_67, %c10, %c0_68] : memref<1x16x128xf32, #tpu.memory_space<vmem>>, vector<1x1x128xf32>
    %72 = vector.shape_cast %71 : vector<1x1x128xf32> to vector<1x128xf32>
    %cst_69 = arith.constant 0.000000e+00 : f32
    %73 = vector.broadcast %cst_69 : f32 to vector<1x128xf32>
    %74 = arith.maximumf %72, %73 : vector<1x128xf32>
    %c0_70 = arith.constant 0 : index
    %c11 = arith.constant 11 : index
    %c0_71 = arith.constant 0 : index
    %75 = vector.load %arg9[%c0_70, %c11, %c0_71] : memref<1x16x128xf32, #tpu.memory_space<vmem>>, vector<1x1x128xf32>
    %76 = vector.shape_cast %75 : vector<1x1x128xf32> to vector<1x128xf32>
    %cst_72 = arith.constant 0.000000e+00 : f32
    %77 = vector.broadcast %cst_72 : f32 to vector<1x128xf32>
    %78 = arith.maximumf %76, %77 : vector<1x128xf32>
    %c0_73 = arith.constant 0 : index
    %c12 = arith.constant 12 : index
    %c0_74 = arith.constant 0 : index
    %79 = vector.load %arg9[%c0_73, %c12, %c0_74] : memref<1x16x128xf32, #tpu.memory_space<vmem>>, vector<1x1x128xf32>
    %80 = vector.shape_cast %79 : vector<1x1x128xf32> to vector<1x128xf32>
    %cst_75 = arith.constant 0.000000e+00 : f32
    %81 = vector.broadcast %cst_75 : f32 to vector<1x128xf32>
    %82 = arith.maximumf %80, %81 : vector<1x128xf32>
    %c0_76 = arith.constant 0 : index
    %c13 = arith.constant 13 : index
    %c0_77 = arith.constant 0 : index
    %83 = vector.load %arg9[%c0_76, %c13, %c0_77] : memref<1x16x128xf32, #tpu.memory_space<vmem>>, vector<1x1x128xf32>
    %84 = vector.shape_cast %83 : vector<1x1x128xf32> to vector<1x128xf32>
    %cst_78 = arith.constant 0.000000e+00 : f32
    %85 = vector.broadcast %cst_78 : f32 to vector<1x128xf32>
    %86 = arith.maximumf %84, %85 : vector<1x128xf32>
    %c0_79 = arith.constant 0 : index
    %c14 = arith.constant 14 : index
    %c0_80 = arith.constant 0 : index
    %87 = vector.load %arg9[%c0_79, %c14, %c0_80] : memref<1x16x128xf32, #tpu.memory_space<vmem>>, vector<1x1x128xf32>
    %88 = vector.shape_cast %87 : vector<1x1x128xf32> to vector<1x128xf32>
    %cst_81 = arith.constant 0.000000e+00 : f32
    %89 = vector.broadcast %cst_81 : f32 to vector<1x128xf32>
    %90 = arith.maximumf %88, %89 : vector<1x128xf32>
    %c0_82 = arith.constant 0 : index
    %c15 = arith.constant 15 : index
    %c0_83 = arith.constant 0 : index
    %91 = vector.load %arg9[%c0_82, %c15, %c0_83] : memref<1x16x128xf32, #tpu.memory_space<vmem>>, vector<1x1x128xf32>
    %92 = vector.shape_cast %91 : vector<1x1x128xf32> to vector<1x128xf32>
    %cst_84 = arith.constant 0.000000e+00 : f32
    %93 = vector.broadcast %cst_84 : f32 to vector<1x128xf32>
    %94 = arith.maximumf %92, %93 : vector<1x128xf32>
    %95 = tpu.concatenate %34, %38, %42, %46, %50, %54, %58, %62, %66, %70, %74, %78, %82, %86, %90, %94 in 1 : vector<1x128xf32>, vector<1x128xf32>, vector<1x128xf32>, vector<1x128xf32>, vector<1x128xf32>, vector<1x128xf32>, vector<1x128xf32>, vector<1x128xf32>, vector<1x128xf32>, vector<1x128xf32>, vector<1x128xf32>, vector<1x128xf32>, vector<1x128xf32>, vector<1x128xf32>, vector<1x128xf32>, vector<1x128xf32> -> vector<1x2048xf32>
    %c0_85 = arith.constant 0 : index
    %c0_86 = arith.constant 0 : index
    %96 = vector.load %arg6[%c0_85, %c0_86] : memref<2048x10xf32, #tpu.memory_space<vmem>>, vector<2048x10xf32>
    %cst_87 = arith.constant dense<0.000000e+00> : vector<1x10xf32>
    %97 = tpu.matmul %95, %96, %cst_87 {dimension_numbers = #tpu.dot_dimension_numbers<[1], [0], [0], [1], [0, 0, 1, 1], [], []>} : vector<1x2048xf32>, vector<2048x10xf32>, vector<1x10xf32> -> vector<1x10xf32>
    %c0_88 = arith.constant 0 : index
    %c0_89 = arith.constant 0 : index
    %98 = vector.load %arg7[%c0_88, %c0_89] : memref<1x10xf32, #tpu.memory_space<vmem>>, vector<1x10xf32>
    %99 = arith.addf %97, %98 : vector<1x10xf32>
    %100 = vector.shape_cast %99 : vector<1x10xf32> to vector<1x1x10xf32>
    %c0_90 = arith.constant 0 : index
    %c0_91 = arith.constant 0 : index
    %c0_92 = arith.constant 0 : index
    %101 = vector.load %arg10[%c0_90, %c0_91, %c0_92] : memref<1x1x10xf32, #tpu.memory_space<vmem>>, vector<1x1x10xf32>
    tpu.vector_store %arg10[%c0_90, %c0_91, %c0_92], %100 {strides = array<i32>} : memref<1x1x10xf32, #tpu.memory_space<vmem>>, vector<1x1x10xf32>,
    return
  }
  func.func @transform_0(%arg0: i32) -> (i32, i32, i32) {
    %c0_i32 = arith.constant 0 : i32
    %c0_i32_0 = arith.constant 0 : i32
    %c0_i32_1 = arith.constant 0 : i32
    return %arg0, %c0_i32, %c0_i32_0 : i32, i32, i32
  }
  func.func @transform_1(%arg0: i32) -> (i32, i32) {
    %c0_i32 = arith.constant 0 : i32
    %c0_i32_0 = arith.constant 0 : i32
    %c0_i32_1 = arith.constant 0 : i32
    return %c0_i32, %c0_i32_0 : i32, i32
  }
  func.func @transform_2(%arg0: i32) -> (i32, i32) {
    %c0_i32 = arith.constant 0 : i32
    %c0_i32_0 = arith.constant 0 : i32
    %c0_i32_1 = arith.constant 0 : i32
    return %c0_i32, %c0_i32_0 : i32, i32
  }
  func.func @transform_3(%arg0: i32) -> (i32, i32) {
    %c0_i32 = arith.constant 0 : i32
    %c0_i32_0 = arith.constant 0 : i32
    %c0_i32_1 = arith.constant 0 : i32
    return %c0_i32, %c0_i32_0 : i32, i32
  }
  func.func @transform_4(%arg0: i32) -> (i32, i32) {
    %c0_i32 = arith.constant 0 : i32
    %c0_i32_0 = arith.constant 0 : i32
    %c0_i32_1 = arith.constant 0 : i32
    return %c0_i32, %c0_i32_0 : i32, i32
  }
  func.func @transform_5(%arg0: i32) -> (i32, i32) {
    %c0_i32 = arith.constant 0 : i32
    %c0_i32_0 = arith.constant 0 : i32
    %c0_i32_1 = arith.constant 0 : i32
    return %c0_i32, %c0_i32_0 : i32, i32
  }
  func.func @transform_6(%arg0: i32) -> (i32, i32) {
    %c0_i32 = arith.constant 0 : i32
    %c0_i32_0 = arith.constant 0 : i32
    %c0_i32_1 = arith.constant 0 : i32
    return %c0_i32, %c0_i32_0 : i32, i32
  }
  func.func @transform_7(%arg0: i32) -> (i32, i32, i32) {
    %c0_i32 = arith.constant 0 : i32
    %c0_i32_0 = arith.constant 0 : i32
    %c0_i32_1 = arith.constant 0 : i32
    return %arg0, %c0_i32, %c0_i32_0 : i32, i32, i32
  }
  func.func @transform_8(%arg0: i32) -> (i32, i32, i32) {
    %c0_i32 = arith.constant 0 : i32
    %c0_i32_0 = arith.constant 0 : i32
    %c0_i32_1 = arith.constant 0 : i32
    return %arg0, %c0_i32, %c0_i32_0 : i32, i32, i32
  }
  func.func @transform_9(%arg0: i32) -> (i32, i32, i32) {
    %c0_i32 = arith.constant 0 : i32
    %c0_i32_0 = arith.constant 0 : i32
    %c0_i32_1 = arith.constant 0 : i32
    return %arg0, %c0_i32, %c0_i32_0 : i32, i32, i32
  }
}

</mosaic_0001>

<llo_original>
// kernel: all_sequential_forward.1
$region0: #{all_sequential_forward.1}
  #allocation0 [shape = 'u32[]', space=smem, size = 0x4, offset = 0x4, fixed_abs, tag = 'smem constant byte address 0x4 - core index']
  #allocation1 [shape = 'u32[72,128]{1,0:T(1,128)}', space=vmem, size = 0x9000, scoped, tag = 'internal scratch']
  #allocation2 [shape = 'f32[18,128]{1,0:T(8,128)}', space=vmem, size = 0x3000, scoped, tag = 'scratch operand']
  %s0 = inlined_call_operand.vmem [shape: f32[2,18,128], index: 0, kind: input, shape index: {}]
  %s1 = inlined_call_operand.vmem [shape: f32[384,128], index: 1, kind: input, shape index: {}]
  %s2 = inlined_call_operand.vmem [shape: f32[1,128], index: 2, kind: input, shape index: {}]
  %s3 = inlined_call_operand.vmem [shape: f32[384,128], index: 3, kind: input, shape index: {}]
  %s4 = inlined_call_operand.vmem [shape: f32[1,128], index: 4, kind: input, shape index: {}]
  %s5 = inlined_call_operand.vmem [shape: f32[2048,10], index: 5, kind: input, shape index: {}]
  %s6 = inlined_call_operand.vmem [shape: f32[1,10], index: 6, kind: input, shape index: {}]
  %s7 = inlined_call_operand.vmem [shape: f32[2,16,128], index: 7, kind: output, shape index: {0}]
  %s8 = inlined_call_operand.vmem [shape: f32[2,16,128], index: 8, kind: output, shape index: {1}]
  %s9 = inlined_call_operand.vmem [shape: f32[2,1,10], index: 9, kind: output, shape index: {2}]
  %10 = xla_tuple %s7, %s8, %s9
  %s11 = sld [smem:[#allocation0]]
  $region77: #{all_sequential_forward.1} parent=0
    _
  %s13 = ssub.s32 1, %s11
  %s14 = scalar_select 0, %s13, %s11
  loop: start=0, step=1, limit=4
  $region2: #{all_sequential_forward.1} parent=0 // loop_pre_header
    _
  $region3: #{all_sequential_forward.1} parent=0 // loop_header
    %s16 = sphi 0, %s20
    %p17 = scmp.ge.s32.totalorder %s16, 4
    %s26 = sphi 0, %s28
    %s29 = sphi 0, %s26
    %s30 = sphi 0, %s29
    %s46 = sphi 0, %s30
    %s50 = sphi 0, %s50
    %s52 = sphi 0, %s50
    %s53 = sphi 0, %s52
    %s67 = sphi 0, %s53
    %s71 = sphi 0, %s71
    %s73 = sphi 0, %s71
    %s74 = sphi 0, %s73
    %s88 = sphi 0, %s74
    %s92 = sphi 0, %s92
    %s94 = sphi 0, %s92
    %s95 = sphi 0, %s94
    %s109 = sphi 0, %s95
    %s113 = sphi 0, %s113
    %s115 = sphi 0, %s113
    %s116 = sphi 0, %s115
    %s130 = sphi 0, %s116
    %s134 = sphi 0, %s134
    %s136 = sphi 0, %s134
    %s137 = sphi 0, %s136
    %s151 = sphi 0, %s137
    %s155 = sphi 0, %s155
    %s157 = sphi 0, %s155
    %s158 = sphi 0, %s157
    %s172 = sphi 0, %s158
    %s178 = sphi 0, %s180
    %s181 = sphi 0, %s178
    %s182 = sphi 0, %s181
    %s198 = sphi 0, %s182
    %s204 = sphi 0, %s206
    %s207 = sphi 0, %s204
    %s208 = sphi 0, %s207
    %s224 = sphi 0, %s208
    %s230 = sphi 0, %s232
    %s233 = sphi 0, %s230
    %s234 = sphi 0, %s233
    %s250 = sphi 0, %s234
  $region4: #{all_sequential_forward.1} parent=0 // loop_header_branch
    %19 = sbr.rel (%p17) target = $region8
  $region5: #{all_sequential_forward.1} parent=0 // loop_body
    %s21 = ssub.s32 %s16, 1
    %s22 = ssub.s32 %s16, 2
    %s23 = sadd.s32 %s16, 1
    %s24 = ssub.s32 %s16, %s23
    %p25 = scmp.eq.s32.totalorder %s24, 0
    %s27 = sadd.s32 %s26, 1
    %s28 = scalar_select %p25, %s26, %s27
    %p31 = pneg %p25
    %p32 = scmp.eq.s32.totalorder %s16, 1
    %p33 = por %p31, %p32
    %p34 = scmp.ne.s32.totalorder %s26, %s29
    %p35 = scmp.eq.s32.totalorder %s16, 0
    %p36 = por %p34, %p35
    %p37 = scmp.ne.s32.totalorder %s26, %s29
    %p38 = scmp.eq.s32.totalorder %s21, 1
    %p39 = por %p37, %p38
    %p40 = scmp.ne.s32.totalorder %s29, %s30
    %p41 = scmp.eq.s32.totalorder %s21, 0
    %p42 = por %p40, %p41
    %p43 = scmp.ne.s32.totalorder %s29, %s30
    %p44 = scmp.eq.s32.totalorder %s22, 1
    %p45 = por %p43, %p44
    %p47 = scmp.ne.s32.totalorder %s30, %s46
    %p48 = scmp.eq.s32.totalorder %s22, 0
    %p49 = por %p47, %p48
    %s51 = sadd.s32 %s50, 1
    %p54 = scmp.eq.s32.totalorder %s16, 1
    %p55 = scmp.ne.s32.totalorder %s50, %s52
    %p56 = scmp.eq.s32.totalorder %s16, 0
    %p57 = por %p55, %p56
    %p58 = scmp.ne.s32.totalorder %s50, %s52
    %p59 = scmp.eq.s32.totalorder %s21, 1
    %p60 = por %p58, %p59
    %p61 = scmp.ne.s32.totalorder %s52, %s53
    %p62 = scmp.eq.s32.totalorder %s21, 0
    %p63 = por %p61, %p62
    %p64 = scmp.ne.s32.totalorder %s52, %s53
    %p65 = scmp.eq.s32.totalorder %s22, 1
    %p66 = por %p64, %p65
    %p68 = scmp.ne.s32.totalorder %s53, %s67
    %p69 = scmp.eq.s32.totalorder %s22, 0
    %p70 = por %p68, %p69
    %s72 = sadd.s32 %s71, 1
    %p75 = scmp.eq.s32.totalorder %s16, 1
    %p76 = scmp.ne.s32.totalorder %s71, %s73
    %p77 = scmp.eq.s32.totalorder %s16, 0
    %p78 = por %p76, %p77
    %p79 = scmp.ne.s32.totalorder %s71, %s73
    %p80 = scmp.eq.s32.totalorder %s21, 1
    %p81 = por %p79, %p80
    %p82 = scmp.ne.s32.totalorder %s73, %s74
    %p83 = scmp.eq.s32.totalorder %s21, 0
    %p84 = por %p82, %p83
    %p85 = scmp.ne.s32.totalorder %s73, %s74
    %p86 = scmp.eq.s32.totalorder %s22, 1
    %p87 = por %p85, %p86
    %p89 = scmp.ne.s32.totalorder %s74, %s88
    %p90 = scmp.eq.s32.totalorder %s22, 0
    %p91 = por %p89, %p90
    %s93 = sadd.s32 %s92, 1
    %p96 = scmp.eq.s32.totalorder %s16, 1
    %p97 = scmp.ne.s32.totalorder %s92, %s94
    %p98 = scmp.eq.s32.totalorder %s16, 0
    %p99 = por %p97, %p98
    %p100 = scmp.ne.s32.totalorder %s92, %s94
    %p101 = scmp.eq.s32.totalorder %s21, 1
    %p102 = por %p100, %p101
    %p103 = scmp.ne.s32.totalorder %s94, %s95
    %p104 = scmp.eq.s32.totalorder %s21, 0
    %p105 = por %p103, %p104
    %p106 = scmp.ne.s32.totalorder %s94, %s95
    %p107 = scmp.eq.s32.totalorder %s22, 1
    %p108 = por %p106, %p107
    %p110 = scmp.ne.s32.totalorder %s95, %s109
    %p111 = scmp.eq.s32.totalorder %s22, 0
    %p112 = por %p110, %p111
    %s114 = sadd.s32 %s113, 1
    %p117 = scmp.eq.s32.totalorder %s16, 1
    %p118 = scmp.ne.s32.totalorder %s113, %s115
    %p119 = scmp.eq.s32.totalorder %s16, 0
    %p120 = por %p118, %p119
    %p121 = scmp.ne.s32.totalorder %s113, %s115
    %p122 = scmp.eq.s32.totalorder %s21, 1
    %p123 = por %p121, %p122
    %p124 = scmp.ne.s32.totalorder %s115, %s116
    %p125 = scmp.eq.s32.totalorder %s21, 0
    %p126 = por %p124, %p125
    %p127 = scmp.ne.s32.totalorder %s115, %s116
    %p128 = scmp.eq.s32.totalorder %s22, 1
    %p129 = por %p127, %p128
    %p131 = scmp.ne.s32.totalorder %s116, %s130
    %p132 = scmp.eq.s32.totalorder %s22, 0
    %p133 = por %p131, %p132
    %s135 = sadd.s32 %s134, 1
    %p138 = scmp.eq.s32.totalorder %s16, 1
    %p139 = scmp.ne.s32.totalorder %s134, %s136
    %p140 = scmp.eq.s32.totalorder %s16, 0
    %p141 = por %p139, %p140
    %p142 = scmp.ne.s32.totalorder %s134, %s136
    %p143 = scmp.eq.s32.totalorder %s21, 1
    %p144 = por %p142, %p143
    %p145 = scmp.ne.s32.totalorder %s136, %s137
    %p146 = scmp.eq.s32.totalorder %s21, 0
    %p147 = por %p145, %p146
    %p148 = scmp.ne.s32.totalorder %s136, %s137
    %p149 = scmp.eq.s32.totalorder %s22, 1
    %p150 = por %p148, %p149
    %p152 = scmp.ne.s32.totalorder %s137, %s151
    %p153 = scmp.eq.s32.totalorder %s22, 0
    %p154 = por %p152, %p153
    %s156 = sadd.s32 %s155, 1
    %p159 = scmp.eq.s32.totalorder %s16, 1
    %p160 = scmp.ne.s32.totalorder %s155, %s157
    %p161 = scmp.eq.s32.totalorder %s16, 0
    %p162 = por %p160, %p161
    %p163 = scmp.ne.s32.totalorder %s155, %s157
    %p164 = scmp.eq.s32.totalorder %s21, 1
    %p165 = por %p163, %p164
    %p166 = scmp.ne.s32.totalorder %s157, %s158
    %p167 = scmp.eq.s32.totalorder %s21, 0
    %p168 = por %p166, %p167
    %p169 = scmp.ne.s32.totalorder %s157, %s158
    %p170 = scmp.eq.s32.totalorder %s22, 1
    %p171 = por %p169, %p170
    %p173 = scmp.ne.s32.totalorder %s158, %s172
    %p174 = scmp.eq.s32.totalorder %s22, 0
    %p175 = por %p173, %p174
    %s176 = ssub.s32 %s16, %s23
    %p177 = scmp.eq.s32.totalorder %s176, 0
    %s179 = sadd.s32 %s178, 1
    %s180 = scalar_select %p177, %s178, %s179
    %p183 = pneg %p177
    %p184 = scmp.eq.s32.totalorder %s16, 1
    %p185 = por %p183, %p184
    %p186 = scmp.ne.s32.totalorder %s178, %s181
    %p187 = scmp.eq.s32.totalorder %s16, 0
    %p188 = por %p186, %p187
    %p189 = scmp.ne.s32.totalorder %s178, %s181
    %p190 = scmp.eq.s32.totalorder %s21, 1
    %p191 = por %p189, %p190
    %p192 = scmp.ne.s32.totalorder %s181, %s182
    %p193 = scmp.eq.s32.totalorder %s21, 0
    %p194 = por %p192, %p193
    %p195 = scmp.ne.s32.totalorder %s181, %s182
    %p196 = scmp.eq.s32.totalorder %s22, 1
    %p197 = por %p195, %p196
    %p199 = scmp.ne.s32.totalorder %s182, %s198
    %p200 = scmp.eq.s32.totalorder %s22, 0
    %p201 = por %p199, %p200
    %s202 = ssub.s32 %s16, %s23
    %p203 = scmp.eq.s32.totalorder %s202, 0
    %s205 = sadd.s32 %s204, 1
    %s206 = scalar_select %p203, %s204, %s205
    %p209 = pneg %p203
    %p210 = scmp.eq.s32.totalorder %s16, 1
    %p211 = por %p209, %p210
    %p212 = scmp.ne.s32.totalorder %s204, %s207
    %p213 = scmp.eq.s32.totalorder %s16, 0
    %p214 = por %p212, %p213
    %p215 = scmp.ne.s32.totalorder %s204, %s207
    %p216 = scmp.eq.s32.totalorder %s21, 1
    %p217 = por %p215, %p216
    %p218 = scmp.ne.s32.totalorder %s207, %s208
    %p219 = scmp.eq.s32.totalorder %s21, 0
    %p220 = por %p218, %p219
    %p221 = scmp.ne.s32.totalorder %s207, %s208
    %p222 = scmp.eq.s32.totalorder %s22, 1
    %p223 = por %p221, %p222
    %p225 = scmp.ne.s32.totalorder %s208, %s224
    %p226 = scmp.eq.s32.totalorder %s22, 0
    %p227 = por %p225, %p226
    %s228 = ssub.s32 %s16, %s23
    %p229 = scmp.eq.s32.totalorder %s228, 0
    %s231 = sadd.s32 %s230, 1
    %s232 = scalar_select %p229, %s230, %s231
    %p235 = pneg %p229
    %p236 = scmp.eq.s32.totalorder %s16, 1
    %p237 = por %p235, %p236
    %p238 = scmp.ne.s32.totalorder %s230, %s233
    %p239 = scmp.eq.s32.totalorder %s16, 0
    %p240 = por %p238, %p239
    %p241 = scmp.ne.s32.totalorder %s230, %s233
    %p242 = scmp.eq.s32.totalorder %s21, 1
    %p243 = por %p241, %p242
    %p244 = scmp.ne.s32.totalorder %s233, %s234
    %p245 = scmp.eq.s32.totalorder %s21, 0
    %p246 = por %p244, %p245
    %p247 = scmp.ne.s32.totalorder %s233, %s234
    %p248 = scmp.eq.s32.totalorder %s22, 1
    %p249 = por %p247, %p248
    %p251 = scmp.ne.s32.totalorder %s234, %s250
    %p252 = scmp.eq.s32.totalorder %s22, 0
    %p253 = por %p251, %p252
    %p254 = scmp.le.s32.totalorder 1, %s16
    %p255 = scmp.lt.s32.totalorder %s16, 3
    %p256 = pnand %p254, %p255
    %p257 = pneg %p256
    // Predicated region
    $region9: #{all_sequential_forward.1} parent=5 // pred_check
      _
    $region10: #{all_sequential_forward.1} parent=5 // pred_check_branch
      %259 = sbr.rel (%p256) target = $region12
    $region11: #{all_sequential_forward.1} parent=5 // pred_region
      %s260 = ssub.s32 %s16, 1
      // Predicated region
      $region13: #{all_sequential_forward.1} parent=11 // pred_check
        %p261 = pneg %p63
      $region14: #{all_sequential_forward.1} parent=11 // pred_check_branch
        %263 = sbr.rel (%p261) target = $region16
      $region15: #{all_sequential_forward.1} parent=11 // pred_region
        _
      $region16: #{all_sequential_forward.1} parent=11 // pred_fallthru
        _
      // Predicated region
      $region17: #{all_sequential_forward.1} parent=11 // pred_check
        %p264 = pneg %p84
      $region18: #{all_sequential_forward.1} parent=11 // pred_check_branch
        %266 = sbr.rel (%p264) target = $region20
      $region19: #{all_sequential_forward.1} parent=11 // pred_region
        _
      $region20: #{all_sequential_forward.1} parent=11 // pred_fallthru
        _
      // Predicated region
      $region21: #{all_sequential_forward.1} parent=11 // pred_check
        %p267 = pneg %p105
      $region22: #{all_sequential_forward.1} parent=11 // pred_check_branch
        %269 = sbr.rel (%p267) target = $region24
      $region23: #{all_sequential_forward.1} parent=11 // pred_region
        _
      $region24: #{all_sequential_forward.1} parent=11 // pred_fallthru
        _
      // Predicated region
      $region25: #{all_sequential_forward.1} parent=11 // pred_check
        %p270 = pneg %p126
      $region26: #{all_sequential_forward.1} parent=11 // pred_check_branch
        %272 = sbr.rel (%p270) target = $region28
      $region27: #{all_sequential_forward.1} parent=11 // pred_region
        _
      $region28: #{all_sequential_forward.1} parent=11 // pred_fallthru
        _
      // Predicated region
      $region29: #{all_sequential_forward.1} parent=11 // pred_check
        %p273 = pneg %p147
      $region30: #{all_sequential_forward.1} parent=11 // pred_check_branch
        %275 = sbr.rel (%p273) target = $region32
      $region31: #{all_sequential_forward.1} parent=11 // pred_region
        _
      $region32: #{all_sequential_forward.1} parent=11 // pred_fallthru
        _
      // Predicated region
      $region33: #{all_sequential_forward.1} parent=11 // pred_check
        %p276 = pneg %p168
      $region34: #{all_sequential_forward.1} parent=11 // pred_check_branch
        %278 = sbr.rel (%p276) target = $region36
      $region35: #{all_sequential_forward.1} parent=11 // pred_region
        _
      $region36: #{all_sequential_forward.1} parent=11 // pred_fallthru
        _
    $region12: #{all_sequential_forward.1} parent=5 // pred_fallthru
      _
    %p279 = scmp.lt.s32.totalorder %s16, 2
    // Predicated region
    $region37: #{all_sequential_forward.1} parent=5 // pred_check
      %p280 = pneg %p279
    $region38: #{all_sequential_forward.1} parent=5 // pred_check_branch
      %282 = sbr.rel (%p280) target = $region40
    $region39: #{all_sequential_forward.1} parent=5 // pred_region
      // Predicated region
      $region41: #{all_sequential_forward.1} parent=39 // pred_check
        %p283 = pneg %p36
      $region42: #{all_sequential_forward.1} parent=39 // pred_check_branch
        %285 = sbr.rel (%p283) target = $region44
      $region43: #{all_sequential_forward.1} parent=39 // pred_region
        %p286 = scmp.lt.s32.totalorder %s16, 1
        %s287 = scalar_select %p286, %s16, 1
        %s288 = smul.addr %s287, 3
        %s289 = smul.addr %s288, 8
        %s290 = scalar_lea.vmem %s0, %s289
      $region44: #{all_sequential_forward.1} parent=39 // pred_fallthru
        _
    $region40: #{all_sequential_forward.1} parent=5 // pred_fallthru
      _
    %p291 = scmp.le.s32.totalorder 1, %s16
    %p292 = scmp.lt.s32.totalorder %s16, 3
    %p293 = pnand %p291, %p292
    %p294 = pneg %p293
    // Predicated region
    $region45: #{all_sequential_forward.1} parent=5 // pred_check
      _
    $region46: #{all_sequential_forward.1} parent=5 // pred_check_branch
      %296 = sbr.rel (%p293) target = $region48
    $region47: #{all_sequential_forward.1} parent=5 // pred_region
      %s297 = ssub.s32 %s16, 1
      %p298 = scmp.lt.s32.totalorder %s21, 1
      %s299 = scalar_select %p298, %s21, 1
      %s300 = smul.addr %s299, 3
      %s301 = smul.addr %s300, 8
      %s302 = scalar_lea.vmem %s0, %s301
      %p303 = pneg %p42
      %p304 = pneg %p39
      %p305 = pneg %p63
      %p306 = pneg %p60
      %p307 = pneg %p84
      %p308 = pneg %p81
      %p309 = pneg %p105
      %p310 = pneg %p102
      %p311 = pneg %p126
      %p312 = pneg %p123
      %p313 = pneg %p147
      %p314 = pneg %p144
      %p315 = pneg %p168
      %p316 = pneg %p165
      %p317 = pneg %p194
      %p318 = pneg %p191
      %p319 = scmp.lt.s32.totalorder %s21, 1
      %s320 = scalar_select %p319, %s21, 1
      %s321 = smul.addr %s320, 2
      %s322 = smul.addr %s321, 8
      %s323 = scalar_lea.vmem %s7, %s322
      %p324 = pneg %p220
      %p325 = pneg %p217
      %p326 = scmp.lt.s32.totalorder %s21, 1
      %s327 = scalar_select %p326, %s21, 1
      %s328 = smul.addr %s327, 2
      %s329 = smul.addr %s328, 8
      %s330 = scalar_lea.vmem %s8, %s329
      %p331 = pneg %p246
      %p332 = pneg %p243
      %p333 = scmp.lt.s32.totalorder %s21, 1
      %s334 = scalar_select %p333, %s21, 1
      %s335 = scalar_lea.vmem %s9, %s334
      %p336 = scmp.lt.s32.totalorder %s21, 1
      %s337 = scalar_select %p336, %s21, 1
      %s338 = smul.addr %s337, 3
      %s339 = smul.addr %s338, 8
      %s340 = scalar_lea.vmem %s0, %s339
      %p341 = scmp.lt.s32.totalorder %s21, 1
      %s342 = scalar_select %p341, %s21, 1
      %s343 = smul.addr %s342, 2
      %s344 = smul.addr %s343, 8
      %s345 = scalar_lea.vmem %s7, %s344
      %p346 = scmp.lt.s32.totalorder %s21, 1
      %s347 = scalar_select %p346, %s21, 1
      %s348 = smul.addr %s347, 2
      %s349 = smul.addr %s348, 8
      %s350 = scalar_lea.vmem %s8, %s349
      %p351 = scmp.lt.s32.totalorder %s21, 1
      %s352 = scalar_select %p351, %s21, 1
      %s353 = scalar_lea.vmem %s9, %s352
      %v354 = vld [vmem:[%s340] sm:$0xff]
      %v355 = vld [vmem:[%s340 + $0x8] sm:$0xff]
      %v356 = vld [vmem:[%s340 + $0x1] sm:$0xff]
      %v357 = vld [vmem:[%s340 + $0x9] sm:$0xff]
      %v358 = vld [vmem:[%s340 + $0x2] sm:$0xff]
      %v359 = vld [vmem:[%s340 + $0xa] sm:$0xff]
      %v360 = vld [vmem:[%s1] sm:$0xff]
      %v361 = vld [vmem:[%s1 + $0x8] sm:$0xff]
      %v362 = vld [vmem:[%s1 + $0x10] sm:$0xff]
      %v363 = vld [vmem:[%s1 + $0x18] sm:$0xff]
      %v364 = vld [vmem:[%s1 + $0x20] sm:$0xff]
      %v365 = vld [vmem:[%s1 + $0x28] sm:$0xff]
      %v366 = vld [vmem:[%s1 + $0x30] sm:$0xff]
      %v367 = vld [vmem:[%s1 + $0x38] sm:$0xff]
      %v368 = vld [vmem:[%s1 + $0x40] sm:$0xff]
      %v369 = vld [vmem:[%s1 + $0x48] sm:$0xff]
      %v370 = vld [vmem:[%s1 + $0x50] sm:$0xff]
      %v371 = vld [vmem:[%s1 + $0x58] sm:$0xff]
      %v372 = vld [vmem:[%s1 + $0x60] sm:$0xff]
      %v373 = vld [vmem:[%s1 + $0x68] sm:$0xff]
      %v374 = vld [vmem:[%s1 + $0x70] sm:$0xff]
      %v375 = vld [vmem:[%s1 + $0x78] sm:$0xff]
      %v376 = vld [vmem:[%s1 + $0x80] sm:$0xff]
      %v377 = vld [vmem:[%s1 + $0x88] sm:$0xff]
      %v378 = vld [vmem:[%s1 + $0x90] sm:$0xff]
      %v379 = vld [vmem:[%s1 + $0x98] sm:$0xff]
      %v380 = vld [vmem:[%s1 + $0xa0] sm:$0xff]
      %v381 = vld [vmem:[%s1 + $0xa8] sm:$0xff]
      %v382 = vld [vmem:[%s1 + $0xb0] sm:$0xff]
      %v383 = vld [vmem:[%s1 + $0xb8] sm:$0xff]
      %v384 = vld [vmem:[%s1 + $0xc0] sm:$0xff]
      %v385 = vld [vmem:[%s1 + $0xc8] sm:$0xff]
      %v386 = vld [vmem:[%s1 + $0xd0] sm:$0xff]
      %v387 = vld [vmem:[%s1 + $0xd8] sm:$0xff]
      %v388 = vld [vmem:[%s1 + $0xe0] sm:$0xff]
      %v389 = vld [vmem:[%s1 + $0xe8] sm:$0xff]
      %v390 = vld [vmem:[%s1 + $0xf0] sm:$0xff]
      %v391 = vld [vmem:[%s1 + $0xf8] sm:$0xff]
      %v392 = vld [vmem:[%s1 + $0x100] sm:$0xff]
      %v393 = vld [vmem:[%s1 + $0x108] sm:$0xff]
      %v394 = vld [vmem:[%s1 + $0x110] sm:$0xff]
      %v395 = vld [vmem:[%s1 + $0x118] sm:$0xff]
      %v396 = vld [vmem:[%s1 + $0x120] sm:$0xff]
      %v397 = vld [vmem:[%s1 + $0x128] sm:$0xff]
      %v398 = vld [vmem:[%s1 + $0x130] sm:$0xff]
      %v399 = vld [vmem:[%s1 + $0x138] sm:$0xff]
      %v400 = vld [vmem:[%s1 + $0x140] sm:$0xff]
      %v401 = vld [vmem:[%s1 + $0x148] sm:$0xff]
      %v402 = vld [vmem:[%s1 + $0x150] sm:$0xff]
      %v403 = vld [vmem:[%s1 + $0x158] sm:$0xff]
      %v404 = vld [vmem:[%s1 + $0x160] sm:$0xff]
      %v405 = vld [vmem:[%s1 + $0x168] sm:$0xff]
      %v406 = vld [vmem:[%s1 + $0x170] sm:$0xff]
      %v407 = vld [vmem:[%s1 + $0x178] sm:$0xff]
      %v408 = vld [vmem:[%s2] sm:$0x1]
      %v410 = vperm.slane %v408, 0
      %412 = vmatpush.msra.mxu0 %v375
      %413 = vmatpush.msra.mxu0 %v374
      %414 = vmatpush.msra.mxu0 %v373
      %415 = vmatpush.msra.mxu0 %v372
      %416 = vmatpush.msra.mxu0 %v371
      %417 = vmatpush.msra.mxu0 %v370
      %418 = vmatpush.msra.mxu0 %v369
      %419 = vmatpush.msra.mxu0 %v368
      %420 = vmatpush.msra.mxu0 %v367
      %421 = vmatpush.msra.mxu0 %v366
      %422 = vmatpush.msra.mxu0 %v365
      %423 = vmatpush.msra.mxu0 %v364
      %424 = vmatpush.msra.mxu0 %v363
      %425 = vmatpush.msra.mxu0 %v362
      %426 = vmatpush.msra.mxu0 %v361
      %427 = vmatpush.msra.mxu0 %v360
      %428 = vmatmul.f32.gmra.mxu0 %v354
      %v429 = vpop.f32.mrf.mxu0
      %v430 = vadd.f32 %v410, %v429
      %431 = vmatmul.f32.gmra.mxu0 %v355
      %v432 = vpop.f32.mrf.mxu0
      %v433 = vadd.f32 %v410, %v432
      %434 = vdwg.mxu0
      %435 = vmatpush.msra.mxu0 %v391
      %436 = vmatpush.msra.mxu0 %v390
      %437 = vmatpush.msra.mxu0 %v389
      %438 = vmatpush.msra.mxu0 %v388
      %439 = vmatpush.msra.mxu0 %v387
      %440 = vmatpush.msra.mxu0 %v386
      %441 = vmatpush.msra.mxu0 %v385
      %442 = vmatpush.msra.mxu0 %v384
      %443 = vmatpush.msra.mxu0 %v383
      %444 = vmatpush.msra.mxu0 %v382
      %445 = vmatpush.msra.mxu0 %v381
      %446 = vmatpush.msra.mxu0 %v380
      %447 = vmatpush.msra.mxu0 %v379
      %448 = vmatpush.msra.mxu0 %v378
      %449 = vmatpush.msra.mxu0 %v377
      %450 = vmatpush.msra.mxu0 %v376
      %451 = vmatmul.f32.gmra.mxu0 %v356
      %v452 = vpop.f32.mrf.mxu0
      %v453 = vadd.f32 %v430, %v452
      %454 = vmatmul.f32.gmra.mxu0 %v357
      %v455 = vpop.f32.mrf.mxu0
      %v456 = vadd.f32 %v433, %v455
      %457 = vdwg.mxu0
      %458 = vmatpush.msra.mxu0 %v407
      %459 = vmatpush.msra.mxu0 %v406
      %460 = vmatpush.msra.mxu0 %v405
      %461 = vmatpush.msra.mxu0 %v404
      %462 = vmatpush.msra.mxu0 %v403
      %463 = vmatpush.msra.mxu0 %v402
      %464 = vmatpush.msra.mxu0 %v401
      %465 = vmatpush.msra.mxu0 %v400
      %466 = vmatpush.msra.mxu0 %v399
      %467 = vmatpush.msra.mxu0 %v398
      %468 = vmatpush.msra.mxu0 %v397
      %469 = vmatpush.msra.mxu0 %v396
      %470 = vmatpush.msra.mxu0 %v395
      %471 = vmatpush.msra.mxu0 %v394
      %472 = vmatpush.msra.mxu0 %v393
      %473 = vmatpush.msra.mxu0 %v392
      %474 = vmatmul.f32.gmra.mxu0 %v358
      %v475 = vpop.f32.mrf.mxu0
      %v476 = vadd.f32 %v453, %v475
      %477 = vmatmul.f32.gmra.mxu0 %v359
      %v478 = vpop.f32.mrf.mxu0
      %v479 = vadd.f32 %v456, %v478
      %480 = vdwg.mxu0
      %481 = vst [vmem:[%s345] sm:$0xff] %v476
      %482 = vst [vmem:[%s345 + $0x8] sm:$0xff] %v479
      %v483 = vmax.f32 %v476, 0.0
      %v484 = vmax.f32 %v479, 0.0
      %485 = vst [vmem:[#allocation2] sm:$0x1] 0.0
      %486 = vst [vmem:[#allocation2 + $0x11] sm:$0x1] 0.0
      %487 = vst [vmem:[#allocation2 + $0x1] sm:$0xff] %v483
      %488 = vst [vmem:[#allocation2 + $0x9] sm:$0xff] %v484
      %v489 = vld [vmem:[#allocation2] sm:$0xff]
      %v490 = vld [vmem:[#allocation2 + $0x8] sm:$0xff]
      %v491 = vld [vmem:[#allocation2 + $0x1] sm:$0xff]
      %v492 = vld [vmem:[#allocation2 + $0x9] sm:$0xff]
      %v493 = vld [vmem:[#allocation2 + $0x2] sm:$0xff]
      %v494 = vld [vmem:[#allocation2 + $0xa] sm:$0xff]
      %v495 = vld [vmem:[%s3] sm:$0xff]
      %v496 = vld [vmem:[%s3 + $0x8] sm:$0xff]
      %v497 = vld [vmem:[%s3 + $0x10] sm:$0xff]
      %v498 = vld [vmem:[%s3 + $0x18] sm:$0xff]
      %v499 = vld [vmem:[%s3 + $0x20] sm:$0xff]
      %v500 = vld [vmem:[%s3 + $0x28] sm:$0xff]
      %v501 = vld [vmem:[%s3 + $0x30] sm:$0xff]
      %v502 = vld [vmem:[%s3 + $0x38] sm:$0xff]
      %v503 = vld [vmem:[%s3 + $0x40] sm:$0xff]
      %v504 = vld [vmem:[%s3 + $0x48] sm:$0xff]
      %v505 = vld [vmem:[%s3 + $0x50] sm:$0xff]
      %v506 = vld [vmem:[%s3 + $0x58] sm:$0xff]
      %v507 = vld [vmem:[%s3 + $0x60] sm:$0xff]
      %v508 = vld [vmem:[%s3 + $0x68] sm:$0xff]
      %v509 = vld [vmem:[%s3 + $0x70] sm:$0xff]
      %v510 = vld [vmem:[%s3 + $0x78] sm:$0xff]
      %v511 = vld [vmem:[%s3 + $0x80] sm:$0xff]
      %v512 = vld [vmem:[%s3 + $0x88] sm:$0xff]
      %v513 = vld [vmem:[%s3 + $0x90] sm:$0xff]
      %v514 = vld [vmem:[%s3 + $0x98] sm:$0xff]
      %v515 = vld [vmem:[%s3 + $0xa0] sm:$0xff]
      %v516 = vld [vmem:[%s3 + $0xa8] sm:$0xff]
      %v517 = vld [vmem:[%s3 + $0xb0] sm:$0xff]
      %v518 = vld [vmem:[%s3 + $0xb8] sm:$0xff]
      %v519 = vld [vmem:[%s3 + $0xc0] sm:$0xff]
      %v520 = vld [vmem:[%s3 + $0xc8] sm:$0xff]
      %v521 = vld [vmem:[%s3 + $0xd0] sm:$0xff]
      %v522 = vld [vmem:[%s3 + $0xd8] sm:$0xff]
      %v523 = vld [vmem:[%s3 + $0xe0] sm:$0xff]
      %v524 = vld [vmem:[%s3 + $0xe8] sm:$0xff]
      %v525 = vld [vmem:[%s3 + $0xf0] sm:$0xff]
      %v526 = vld [vmem:[%s3 + $0xf8] sm:$0xff]
      %v527 = vld [vmem:[%s3 + $0x100] sm:$0xff]
      %v528 = vld [vmem:[%s3 + $0x108] sm:$0xff]
      %v529 = vld [vmem:[%s3 + $0x110] sm:$0xff]
      %v530 = vld [vmem:[%s3 + $0x118] sm:$0xff]
      %v531 = vld [vmem:[%s3 + $0x120] sm:$0xff]
      %v532 = vld [vmem:[%s3 + $0x128] sm:$0xff]
      %v533 = vld [vmem:[%s3 + $0x130] sm:$0xff]
      %v534 = vld [vmem:[%s3 + $0x138] sm:$0xff]
      %v535 = vld [vmem:[%s3 + $0x140] sm:$0xff]
      %v536 = vld [vmem:[%s3 + $0x148] sm:$0xff]
      %v537 = vld [vmem:[%s3 + $0x150] sm:$0xff]
      %v538 = vld [vmem:[%s3 + $0x158] sm:$0xff]
      %v539 = vld [vmem:[%s3 + $0x160] sm:$0xff]
      %v540 = vld [vmem:[%s3 + $0x168] sm:$0xff]
      %v541 = vld [vmem:[%s3 + $0x170] sm:$0xff]
      %v542 = vld [vmem:[%s3 + $0x178] sm:$0xff]
      %v543 = vld [vmem:[%s4] sm:$0x1]
      %v545 = vperm.slane %v543, 0
      %547 = vmatpush.msra.mxu0 %v510
      %548 = vmatpush.msra.mxu0 %v509
      %549 = vmatpush.msra.mxu0 %v508
      %550 = vmatpush.msra.mxu0 %v507
      %551 = vmatpush.msra.mxu0 %v506
      %552 = vmatpush.msra.mxu0 %v505
      %553 = vmatpush.msra.mxu0 %v504
      %554 = vmatpush.msra.mxu0 %v503
      %555 = vmatpush.msra.mxu0 %v502
      %556 = vmatpush.msra.mxu0 %v501
      %557 = vmatpush.msra.mxu0 %v500
      %558 = vmatpush.msra.mxu0 %v499
      %559 = vmatpush.msra.mxu0 %v498
      %560 = vmatpush.msra.mxu0 %v497
      %561 = vmatpush.msra.mxu0 %v496
      %562 = vmatpush.msra.mxu0 %v495
      %563 = vmatmul.f32.gmra.mxu0 %v489
      %v564 = vpop.f32.mrf.mxu0
      %v565 = vadd.f32 %v545, %v564
      %566 = vmatmul.f32.gmra.mxu0 %v490
      %v567 = vpop.f32.mrf.mxu0
      %v568 = vadd.f32 %v545, %v567
      %569 = vdwg.mxu0
      %570 = vmatpush.msra.mxu0 %v526
      %571 = vmatpush.msra.mxu0 %v525
      %572 = vmatpush.msra.mxu0 %v524
      %573 = vmatpush.msra.mxu0 %v523
      %574 = vmatpush.msra.mxu0 %v522
      %575 = vmatpush.msra.mxu0 %v521
      %576 = vmatpush.msra.mxu0 %v520
      %577 = vmatpush.msra.mxu0 %v519
      %578 = vmatpush.msra.mxu0 %v518
      %579 = vmatpush.msra.mxu0 %v517
      %580 = vmatpush.msra.mxu0 %v516
      %581 = vmatpush.msra.mxu0 %v515
      %582 = vmatpush.msra.mxu0 %v514
      %583 = vmatpush.msra.mxu0 %v513
      %584 = vmatpush.msra.mxu0 %v512
      %585 = vmatpush.msra.mxu0 %v511
      %586 = vmatmul.f32.gmra.mxu0 %v491
      %v587 = vpop.f32.mrf.mxu0
      %v588 = vadd.f32 %v565, %v587
      %589 = vmatmul.f32.gmra.mxu0 %v492
      %v590 = vpop.f32.mrf.mxu0
      %v591 = vadd.f32 %v568, %v590
      %592 = vdwg.mxu0
      %593 = vmatpush.msra.mxu0 %v542
      %594 = vmatpush.msra.mxu0 %v541
      %595 = vmatpush.msra.mxu0 %v540
      %596 = vmatpush.msra.mxu0 %v539
      %597 = vmatpush.msra.mxu0 %v538
      %598 = vmatpush.msra.mxu0 %v537
      %599 = vmatpush.msra.mxu0 %v536
      %600 = vmatpush.msra.mxu0 %v535
      %601 = vmatpush.msra.mxu0 %v534
      %602 = vmatpush.msra.mxu0 %v533
      %603 = vmatpush.msra.mxu0 %v532
      %604 = vmatpush.msra.mxu0 %v531
      %605 = vmatpush.msra.mxu0 %v530
      %606 = vmatpush.msra.mxu0 %v529
      %607 = vmatpush.msra.mxu0 %v528
      %608 = vmatpush.msra.mxu0 %v527
      %609 = vmatmul.f32.gmra.mxu0 %v493
      %v610 = vpop.f32.mrf.mxu0
      %v611 = vadd.f32 %v588, %v610
      %612 = vmatmul.f32.gmra.mxu0 %v494
      %v613 = vpop.f32.mrf.mxu0
      %v614 = vadd.f32 %v591, %v613
      %615 = vdwg.mxu0
      %616 = vst [vmem:[%s350] sm:$0xff] %v611
      %617 = vst [vmem:[%s350 + $0x8] sm:$0xff] %v614
      %v618 = vld [vmem:[%s350] sm:$0x1]
      %v619 = vmax.f32 %v618, 0.0
      %v620 = vld [vmem:[%s350 + $0x1] sm:$0x1]
      %v621 = vmax.f32 %v620, 0.0
      %v622 = vld [vmem:[%s350 + $0x2] sm:$0x1]
      %v623 = vmax.f32 %v622, 0.0
      %v624 = vld [vmem:[%s350 + $0x3] sm:$0x1]
      %v625 = vmax.f32 %v624, 0.0
      %v626 = vld [vmem:[%s350 + $0x4] sm:$0x1]
      %v627 = vmax.f32 %v626, 0.0
      %v628 = vld [vmem:[%s350 + $0x5] sm:$0x1]
      %v629 = vmax.f32 %v628, 0.0
      %v630 = vld [vmem:[%s350 + $0x6] sm:$0x1]
      %v631 = vmax.f32 %v630, 0.0
      %v632 = vld [vmem:[%s350 + $0x7] sm:$0x1]
      %v633 = vmax.f32 %v632, 0.0
      %v634 = vld [vmem:[%s350 + $0x8] sm:$0x1]
      %v635 = vmax.f32 %v634, 0.0
      %v636 = vld [vmem:[%s350 + $0x9] sm:$0x1]
      %v637 = vmax.f32 %v636, 0.0
      %v638 = vld [vmem:[%s350 + $0xa] sm:$0x1]
      %v639 = vmax.f32 %v638, 0.0
      %v640 = vld [vmem:[%s350 + $0xb] sm:$0x1]
      %v641 = vmax.f32 %v640, 0.0
      %v642 = vld [vmem:[%s350 + $0xc] sm:$0x1]
      %v643 = vmax.f32 %v642, 0.0
      %v644 = vld [vmem:[%s350 + $0xd] sm:$0x1]
      %v645 = vmax.f32 %v644, 0.0
      %v646 = vld [vmem:[%s350 + $0xe] sm:$0x1]
      %v647 = vmax.f32 %v646, 0.0
      %v648 = vld [vmem:[%s350 + $0xf] sm:$0x1]
      %v649 = vmax.f32 %v648, 0.0
      %v650 = vld [vmem:[%s5] sm:$0xff]
      %v651 = vld [vmem:[%s5 + $0x8] sm:$0xff]
      %v652 = vld [vmem:[%s5 + $0x10] sm:$0xff]
      %v653 = vld [vmem:[%s5 + $0x18] sm:$0xff]
      %v654 = vld [vmem:[%s5 + $0x20] sm:$0xff]
      %v655 = vld [vmem:[%s5 + $0x28] sm:$0xff]
      %v656 = vld [vmem:[%s5 + $0x30] sm:$0xff]
      %v657 = vld [vmem:[%s5 + $0x38] sm:$0xff]
      %v658 = vld [vmem:[%s5 + $0x40] sm:$0xff]
      %v659 = vld [vmem:[%s5 + $0x48] sm:$0xff]
      %v660 = vld [vmem:[%s5 + $0x50] sm:$0xff]
      %v661 = vld [vmem:[%s5 + $0x58] sm:$0xff]
      %v662 = vld [vmem:[%s5 + $0x60] sm:$0xff]
      %v663 = vld [vmem:[%s5 + $0x68] sm:$0xff]
      %v664 = vld [vmem:[%s5 + $0x70] sm:$0xff]
      %v665 = vld [vmem:[%s5 + $0x78] sm:$0xff]
      %v666 = vld [vmem:[%s5 + $0x80] sm:$0xff]
      %v667 = vld [vmem:[%s5 + $0x88] sm:$0xff]
      %v668 = vld [vmem:[%s5 + $0x90] sm:$0xff]
      %v669 = vld [vmem:[%s5 + $0x98] sm:$0xff]
      %v670 = vld [vmem:[%s5 + $0xa0] sm:$0xff]
      %v671 = vld [vmem:[%s5 + $0xa8] sm:$0xff]
      %v672 = vld [vmem:[%s5 + $0xb0] sm:$0xff]
      %v673 = vld [vmem:[%s5 + $0xb8] sm:$0xff]
      %v674 = vld [vmem:[%s5 + $0xc0] sm:$0xff]
      %v675 = vld [vmem:[%s5 + $0xc8] sm:$0xff]
      %v676 = vld [vmem:[%s5 + $0xd0] sm:$0xff]
      %v677 = vld [vmem:[%s5 + $0xd8] sm:$0xff]
      %v678 = vld [vmem:[%s5 + $0xe0] sm:$0xff]
      %v679 = vld [vmem:[%s5 + $0xe8] sm:$0xff]
      %v680 = vld [vmem:[%s5 + $0xf0] sm:$0xff]
      %v681 = vld [vmem:[%s5 + $0xf8] sm:$0xff]
      %v682 = vld [vmem:[%s5 + $0x100] sm:$0xff]
      %v683 = vld [vmem:[%s5 + $0x108] sm:$0xff]
      %v684 = vld [vmem:[%s5 + $0x110] sm:$0xff]
      %v685 = vld [vmem:[%s5 + $0x118] sm:$0xff]
      %v686 = vld [vmem:[%s5 + $0x120] sm:$0xff]
      %v687 = vld [vmem:[%s5 + $0x128] sm:$0xff]
      %v688 = vld [vmem:[%s5 + $0x130] sm:$0xff]
      %v689 = vld [vmem:[%s5 + $0x138] sm:$0xff]
      %v690 = vld [vmem:[%s5 + $0x140] sm:$0xff]
      %v691 = vld [vmem:[%s5 + $0x148] sm:$0xff]
      %v692 = vld [vmem:[%s5 + $0x150] sm:$0xff]
      %v693 = vld [vmem:[%s5 + $0x158] sm:$0xff]
      %v694 = vld [vmem:[%s5 + $0x160] sm:$0xff]
      %v695 = vld [vmem:[%s5 + $0x168] sm:$0xff]
      %v696 = vld [vmem:[%s5 + $0x170] sm:$0xff]
      %v697 = vld [vmem:[%s5 + $0x178] sm:$0xff]
      %v698 = vld [vmem:[%s5 + $0x180] sm:$0xff]
      %v699 = vld [vmem:[%s5 + $0x188] sm:$0xff]
      %v700 = vld [vmem:[%s5 + $0x190] sm:$0xff]
      %v701 = vld [vmem:[%s5 + $0x198] sm:$0xff]
      %v702 = vld [vmem:[%s5 + $0x1a0] sm:$0xff]
      %v703 = vld [vmem:[%s5 + $0x1a8] sm:$0xff]
      %v704 = vld [vmem:[%s5 + $0x1b0] sm:$0xff]
      %v705 = vld [vmem:[%s5 + $0x1b8] sm:$0xff]
      %v706 = vld [vmem:[%s5 + $0x1c0] sm:$0xff]
      %v707 = vld [vmem:[%s5 + $0x1c8] sm:$0xff]
      %v708 = vld [vmem:[%s5 + $0x1d0] sm:$0xff]
      %v709 = vld [vmem:[%s5 + $0x1d8] sm:$0xff]
      %v710 = vld [vmem:[%s5 + $0x1e0] sm:$0xff]
      %v711 = vld [vmem:[%s5 + $0x1e8] sm:$0xff]
      %v712 = vld [vmem:[%s5 + $0x1f0] sm:$0xff]
      %v713 = vld [vmem:[%s5 + $0x1f8] sm:$0xff]
      %v714 = vld [vmem:[%s5 + $0x200] sm:$0xff]
      %v715 = vld [vmem:[%s5 + $0x208] sm:$0xff]
      %v716 = vld [vmem:[%s5 + $0x210] sm:$0xff]
      %v717 = vld [vmem:[%s5 + $0x218] sm:$0xff]
      %v718 = vld [vmem:[%s5 + $0x220] sm:$0xff]
      %v719 = vld [vmem:[%s5 + $0x228] sm:$0xff]
      %v720 = vld [vmem:[%s5 + $0x230] sm:$0xff]
      %v721 = vld [vmem:[%s5 + $0x238] sm:$0xff]
      %v722 = vld [vmem:[%s5 + $0x240] sm:$0xff]
      %v723 = vld [vmem:[%s5 + $0x248] sm:$0xff]
      %v724 = vld [vmem:[%s5 + $0x250] sm:$0xff]
      %v725 = vld [vmem:[%s5 + $0x258] sm:$0xff]
      %v726 = vld [vmem:[%s5 + $0x260] sm:$0xff]
      %v727 = vld [vmem:[%s5 + $0x268] sm:$0xff]
      %v728 = vld [vmem:[%s5 + $0x270] sm:$0xff]
      %v729 = vld [vmem:[%s5 + $0x278] sm:$0xff]
      %v730 = vld [vmem:[%s5 + $0x280] sm:$0xff]
      %v731 = vld [vmem:[%s5 + $0x288] sm:$0xff]
      %v732 = vld [vmem:[%s5 + $0x290] sm:$0xff]
      %v733 = vld [vmem:[%s5 + $0x298] sm:$0xff]
      %v734 = vld [vmem:[%s5 + $0x2a0] sm:$0xff]
      %v735 = vld [vmem:[%s5 + $0x2a8] sm:$0xff]
      %v736 = vld [vmem:[%s5 + $0x2b0] sm:$0xff]
      %v737 = vld [vmem:[%s5 + $0x2b8] sm:$0xff]
      %v738 = vld [vmem:[%s5 + $0x2c0] sm:$0xff]
      %v739 = vld [vmem:[%s5 + $0x2c8] sm:$0xff]
      %v740 = vld [vmem:[%s5 + $0x2d0] sm:$0xff]
      %v741 = vld [vmem:[%s5 + $0x2d8] sm:$0xff]
      %v742 = vld [vmem:[%s5 + $0x2e0] sm:$0xff]
      %v743 = vld [vmem:[%s5 + $0x2e8] sm:$0xff]
      %v744 = vld [vmem:[%s5 + $0x2f0] sm:$0xff]
      %v745 = vld [vmem:[%s5 + $0x2f8] sm:$0xff]
      %v746 = vld [vmem:[%s5 + $0x300] sm:$0xff]
      %v747 = vld [vmem:[%s5 + $0x308] sm:$0xff]
      %v748 = vld [vmem:[%s5 + $0x310] sm:$0xff]
      %v749 = vld [vmem:[%s5 + $0x318] sm:$0xff]
      %v750 = vld [vmem:[%s5 + $0x320] sm:$0xff]
      %v751 = vld [vmem:[%s5 + $0x328] sm:$0xff]
      %v752 = vld [vmem:[%s5 + $0x330] sm:$0xff]
      %v753 = vld [vmem:[%s5 + $0x338] sm:$0xff]
      %v754 = vld [vmem:[%s5 + $0x340] sm:$0xff]
      %v755 = vld [vmem:[%s5 + $0x348] sm:$0xff]
      %v756 = vld [vmem:[%s5 + $0x350] sm:$0xff]
      %v757 = vld [vmem:[%s5 + $0x358] sm:$0xff]
      %v758 = vld [vmem:[%s5 + $0x360] sm:$0xff]
      %v759 = vld [vmem:[%s5 + $0x368] sm:$0xff]
      %v760 = vld [vmem:[%s5 + $0x370] sm:$0xff]
      %v761 = vld [vmem:[%s5 + $0x378] sm:$0xff]
      %v762 = vld [vmem:[%s5 + $0x380] sm:$0xff]
      %v763 = vld [vmem:[%s5 + $0x388] sm:$0xff]
      %v764 = vld [vmem:[%s5 + $0x390] sm:$0xff]
      %v765 = vld [vmem:[%s5 + $0x398] sm:$0xff]
      %v766 = vld [vmem:[%s5 + $0x3a0] sm:$0xff]
      %v767 = vld [vmem:[%s5 + $0x3a8] sm:$0xff]
      %v768 = vld [vmem:[%s5 + $0x3b0] sm:$0xff]
      %v769 = vld [vmem:[%s5 + $0x3b8] sm:$0xff]
      %v770 = vld [vmem:[%s5 + $0x3c0] sm:$0xff]
      %v771 = vld [vmem:[%s5 + $0x3c8] sm:$0xff]
      %v772 = vld [vmem:[%s5 + $0x3d0] sm:$0xff]
      %v773 = vld [vmem:[%s5 + $0x3d8] sm:$0xff]
      %v774 = vld [vmem:[%s5 + $0x3e0] sm:$0xff]
      %v775 = vld [vmem:[%s5 + $0x3e8] sm:$0xff]
      %v776 = vld [vmem:[%s5 + $0x3f0] sm:$0xff]
      %v777 = vld [vmem:[%s5 + $0x3f8] sm:$0xff]
      %v778 = vld [vmem:[%s5 + $0x400] sm:$0xff]
      %v779 = vld [vmem:[%s5 + $0x408] sm:$0xff]
      %v780 = vld [vmem:[%s5 + $0x410] sm:$0xff]
      %v781 = vld [vmem:[%s5 + $0x418] sm:$0xff]
      %v782 = vld [vmem:[%s5 + $0x420] sm:$0xff]
      %v783 = vld [vmem:[%s5 + $0x428] sm:$0xff]
      %v784 = vld [vmem:[%s5 + $0x430] sm:$0xff]
      %v785 = vld [vmem:[%s5 + $0x438] sm:$0xff]
      %v786 = vld [vmem:[%s5 + $0x440] sm:$0xff]
      %v787 = vld [vmem:[%s5 + $0x448] sm:$0xff]
      %v788 = vld [vmem:[%s5 + $0x450] sm:$0xff]
      %v789 = vld [vmem:[%s5 + $0x458] sm:$0xff]
      %v790 = vld [vmem:[%s5 + $0x460] sm:$0xff]
      %v791 = vld [vmem:[%s5 + $0x468] sm:$0xff]
      %v792 = vld [vmem:[%s5 + $0x470] sm:$0xff]
      %v793 = vld [vmem:[%s5 + $0x478] sm:$0xff]
      %v794 = vld [vmem:[%s5 + $0x480] sm:$0xff]
      %v795 = vld [vmem:[%s5 + $0x488] sm:$0xff]
      %v796 = vld [vmem:[%s5 + $0x490] sm:$0xff]
      %v797 = vld [vmem:[%s5 + $0x498] sm:$0xff]
      %v798 = vld [vmem:[%s5 + $0x4a0] sm:$0xff]
      %v799 = vld [vmem:[%s5 + $0x4a8] sm:$0xff]
      %v800 = vld [vmem:[%s5 + $0x4b0] sm:$0xff]
      %v801 = vld [vmem:[%s5 + $0x4b8] sm:$0xff]
      %v802 = vld [vmem:[%s5 + $0x4c0] sm:$0xff]
      %v803 = vld [vmem:[%s5 + $0x4c8] sm:$0xff]
      %v804 = vld [vmem:[%s5 + $0x4d0] sm:$0xff]
      %v805 = vld [vmem:[%s5 + $0x4d8] sm:$0xff]
      %v806 = vld [vmem:[%s5 + $0x4e0] sm:$0xff]
      %v807 = vld [vmem:[%s5 + $0x4e8] sm:$0xff]
      %v808 = vld [vmem:[%s5 + $0x4f0] sm:$0xff]
      %v809 = vld [vmem:[%s5 + $0x4f8] sm:$0xff]
      %v810 = vld [vmem:[%s5 + $0x500] sm:$0xff]
      %v811 = vld [vmem:[%s5 + $0x508] sm:$0xff]
      %v812 = vld [vmem:[%s5 + $0x510] sm:$0xff]
      %v813 = vld [vmem:[%s5 + $0x518] sm:$0xff]
      %v814 = vld [vmem:[%s5 + $0x520] sm:$0xff]
      %v815 = vld [vmem:[%s5 + $0x528] sm:$0xff]
      %v816 = vld [vmem:[%s5 + $0x530] sm:$0xff]
      %v817 = vld [vmem:[%s5 + $0x538] sm:$0xff]
      %v818 = vld [vmem:[%s5 + $0x540] sm:$0xff]
      %v819 = vld [vmem:[%s5 + $0x548] sm:$0xff]
      %v820 = vld [vmem:[%s5 + $0x550] sm:$0xff]
      %v821 = vld [vmem:[%s5 + $0x558] sm:$0xff]
      %v822 = vld [vmem:[%s5 + $0x560] sm:$0xff]
      %v823 = vld [vmem:[%s5 + $0x568] sm:$0xff]
      %v824 = vld [vmem:[%s5 + $0x570] sm:$0xff]
      %v825 = vld [vmem:[%s5 + $0x578] sm:$0xff]
      %v826 = vld [vmem:[%s5 + $0x580] sm:$0xff]
      %v827 = vld [vmem:[%s5 + $0x588] sm:$0xff]
      %v828 = vld [vmem:[%s5 + $0x590] sm:$0xff]
      %v829 = vld [vmem:[%s5 + $0x598] sm:$0xff]
      %v830 = vld [vmem:[%s5 + $0x5a0] sm:$0xff]
      %v831 = vld [vmem:[%s5 + $0x5a8] sm:$0xff]
      %v832 = vld [vmem:[%s5 + $0x5b0] sm:$0xff]
      %v833 = vld [vmem:[%s5 + $0x5b8] sm:$0xff]
      %v834 = vld [vmem:[%s5 + $0x5c0] sm:$0xff]
      %v835 = vld [vmem:[%s5 + $0x5c8] sm:$0xff]
      %v836 = vld [vmem:[%s5 + $0x5d0] sm:$0xff]
      %v837 = vld [vmem:[%s5 + $0x5d8] sm:$0xff]
      %v838 = vld [vmem:[%s5 + $0x5e0] sm:$0xff]
      %v839 = vld [vmem:[%s5 + $0x5e8] sm:$0xff]
      %v840 = vld [vmem:[%s5 + $0x5f0] sm:$0xff]
      %v841 = vld [vmem:[%s5 + $0x5f8] sm:$0xff]
      %v842 = vld [vmem:[%s5 + $0x600] sm:$0xff]
      %v843 = vld [vmem:[%s5 + $0x608] sm:$0xff]
      %v844 = vld [vmem:[%s5 + $0x610] sm:$0xff]
      %v845 = vld [vmem:[%s5 + $0x618] sm:$0xff]
      %v846 = vld [vmem:[%s5 + $0x620] sm:$0xff]
      %v847 = vld [vmem:[%s5 + $0x628] sm:$0xff]
      %v848 = vld [vmem:[%s5 + $0x630] sm:$0xff]
      %v849 = vld [vmem:[%s5 + $0x638] sm:$0xff]
      %v850 = vld [vmem:[%s5 + $0x640] sm:$0xff]
      %v851 = vld [vmem:[%s5 + $0x648] sm:$0xff]
      %v852 = vld [vmem:[%s5 + $0x650] sm:$0xff]
      %v853 = vld [vmem:[%s5 + $0x658] sm:$0xff]
      %v854 = vld [vmem:[%s5 + $0x660] sm:$0xff]
      %v855 = vld [vmem:[%s5 + $0x668] sm:$0xff]
      %v856 = vld [vmem:[%s5 + $0x670] sm:$0xff]
      %v857 = vld [vmem:[%s5 + $0x678] sm:$0xff]
      %v858 = vld [vmem:[%s5 + $0x680] sm:$0xff]
      %v859 = vld [vmem:[%s5 + $0x688] sm:$0xff]
      %v860 = vld [vmem:[%s5 + $0x690] sm:$0xff]
      %v861 = vld [vmem:[%s5 + $0x698] sm:$0xff]
      %v862 = vld [vmem:[%s5 + $0x6a0] sm:$0xff]
      %v863 = vld [vmem:[%s5 + $0x6a8] sm:$0xff]
      %v864 = vld [vmem:[%s5 + $0x6b0] sm:$0xff]
      %v865 = vld [vmem:[%s5 + $0x6b8] sm:$0xff]
      %v866 = vld [vmem:[%s5 + $0x6c0] sm:$0xff]
      %v867 = vld [vmem:[%s5 + $0x6c8] sm:$0xff]
      %v868 = vld [vmem:[%s5 + $0x6d0] sm:$0xff]
      %v869 = vld [vmem:[%s5 + $0x6d8] sm:$0xff]
      %v870 = vld [vmem:[%s5 + $0x6e0] sm:$0xff]
      %v871 = vld [vmem:[%s5 + $0x6e8] sm:$0xff]
      %v872 = vld [vmem:[%s5 + $0x6f0] sm:$0xff]
      %v873 = vld [vmem:[%s5 + $0x6f8] sm:$0xff]
      %v874 = vld [vmem:[%s5 + $0x700] sm:$0xff]
      %v875 = vld [vmem:[%s5 + $0x708] sm:$0xff]
      %v876 = vld [vmem:[%s5 + $0x710] sm:$0xff]
      %v877 = vld [vmem:[%s5 + $0x718] sm:$0xff]
      %v878 = vld [vmem:[%s5 + $0x720] sm:$0xff]
      %v879 = vld [vmem:[%s5 + $0x728] sm:$0xff]
      %v880 = vld [vmem:[%s5 + $0x730] sm:$0xff]
      %v881 = vld [vmem:[%s5 + $0x738] sm:$0xff]
      %v882 = vld [vmem:[%s5 + $0x740] sm:$0xff]
      %v883 = vld [vmem:[%s5 + $0x748] sm:$0xff]
      %v884 = vld [vmem:[%s5 + $0x750] sm:$0xff]
      %v885 = vld [vmem:[%s5 + $0x758] sm:$0xff]
      %v886 = vld [vmem:[%s5 + $0x760] sm:$0xff]
      %v887 = vld [vmem:[%s5 + $0x768] sm:$0xff]
      %v888 = vld [vmem:[%s5 + $0x770] sm:$0xff]
      %v889 = vld [vmem:[%s5 + $0x778] sm:$0xff]
      %v890 = vld [vmem:[%s5 + $0x780] sm:$0xff]
      %v891 = vld [vmem:[%s5 + $0x788] sm:$0xff]
      %v892 = vld [vmem:[%s5 + $0x790] sm:$0xff]
      %v893 = vld [vmem:[%s5 + $0x798] sm:$0xff]
      %v894 = vld [vmem:[%s5 + $0x7a0] sm:$0xff]
      %v895 = vld [vmem:[%s5 + $0x7a8] sm:$0xff]
      %v896 = vld [vmem:[%s5 + $0x7b0] sm:$0xff]
      %v897 = vld [vmem:[%s5 + $0x7b8] sm:$0xff]
      %v898 = vld [vmem:[%s5 + $0x7c0] sm:$0xff]
      %v899 = vld [vmem:[%s5 + $0x7c8] sm:$0xff]
      %v900 = vld [vmem:[%s5 + $0x7d0] sm:$0xff]
      %v901 = vld [vmem:[%s5 + $0x7d8] sm:$0xff]
      %v902 = vld [vmem:[%s5 + $0x7e0] sm:$0xff]
      %v903 = vld [vmem:[%s5 + $0x7e8] sm:$0xff]
      %v904 = vld [vmem:[%s5 + $0x7f0] sm:$0xff]
      %v905 = vld [vmem:[%s5 + $0x7f8] sm:$0xff]
      %v906 = vld [vmem:[%s6] sm:$0x1]
      %907 = vmatpush.msra.mxu0 %v665
      %908 = vmatpush.msra.mxu0 %v664
      %909 = vmatpush.msra.mxu0 %v663
      %910 = vmatpush.msra.mxu0 %v662
      %911 = vmatpush.msra.mxu0 %v661
      %912 = vmatpush.msra.mxu0 %v660
      %913 = vmatpush.msra.mxu0 %v659
      %914 = vmatpush.msra.mxu0 %v658
      %915 = vmatpush.msra.mxu0 %v657
      %916 = vmatpush.msra.mxu0 %v656
      %917 = vmatpush.msra.mxu0 %v655
      %918 = vmatpush.msra.mxu0 %v654
      %919 = vmatpush.msra.mxu0 %v653
      %920 = vmatpush.msra.mxu0 %v652
      %921 = vmatpush.msra.mxu0 %v651
      %922 = vmatpush.msra.mxu0 %v650
      %923 = vmatmul.f32.gmra.mxu0 %v619
      %v924 = vpop.f32.mrf.mxu0
      %v925 = vadd.f32 %v906, %v924
      %926 = vdwg.mxu0
      %927 = vmatpush.msra.mxu0 %v681
      %928 = vmatpush.msra.mxu0 %v680
      %929 = vmatpush.msra.mxu0 %v679
      %930 = vmatpush.msra.mxu0 %v678
      %931 = vmatpush.msra.mxu0 %v677
      %932 = vmatpush.msra.mxu0 %v676
      %933 = vmatpush.msra.mxu0 %v675
      %934 = vmatpush.msra.mxu0 %v674
      %935 = vmatpush.msra.mxu0 %v673
      %936 = vmatpush.msra.mxu0 %v672
      %937 = vmatpush.msra.mxu0 %v671
      %938 = vmatpush.msra.mxu0 %v670
      %939 = vmatpush.msra.mxu0 %v669
      %940 = vmatpush.msra.mxu0 %v668
      %941 = vmatpush.msra.mxu0 %v667
      %942 = vmatpush.msra.mxu0 %v666
      %943 = vmatmul.f32.gmra.mxu0 %v621
      %v944 = vpop.f32.mrf.mxu0
      %v945 = vadd.f32 %v925, %v944
      %946 = vdwg.mxu0
      %947 = vmatpush.msra.mxu0 %v697
      %948 = vmatpush.msra.mxu0 %v696
      %949 = vmatpush.msra.mxu0 %v695
      %950 = vmatpush.msra.mxu0 %v694
      %951 = vmatpush.msra.mxu0 %v693
      %952 = vmatpush.msra.mxu0 %v692
      %953 = vmatpush.msra.mxu0 %v691
      %954 = vmatpush.msra.mxu0 %v690
      %955 = vmatpush.msra.mxu0 %v689
      %956 = vmatpush.msra.mxu0 %v688
      %957 = vmatpush.msra.mxu0 %v687
      %958 = vmatpush.msra.mxu0 %v686
      %959 = vmatpush.msra.mxu0 %v685
      %960 = vmatpush.msra.mxu0 %v684
      %961 = vmatpush.msra.mxu0 %v683
      %962 = vmatpush.msra.mxu0 %v682
      %963 = vmatmul.f32.gmra.mxu0 %v623
      %v964 = vpop.f32.mrf.mxu0
      %v965 = vadd.f32 %v945, %v964
      %966 = vdwg.mxu0
      %967 = vmatpush.msra.mxu0 %v713
      %968 = vmatpush.msra.mxu0 %v712
      %969 = vmatpush.msra.mxu0 %v711
      %970 = vmatpush.msra.mxu0 %v710
      %971 = vmatpush.msra.mxu0 %v709
      %972 = vmatpush.msra.mxu0 %v708
      %973 = vmatpush.msra.mxu0 %v707
      %974 = vmatpush.msra.mxu0 %v706
      %975 = vmatpush.msra.mxu0 %v705
      %976 = vmatpush.msra.mxu0 %v704
      %977 = vmatpush.msra.mxu0 %v703
      %978 = vmatpush.msra.mxu0 %v702
      %979 = vmatpush.msra.mxu0 %v701
      %980 = vmatpush.msra.mxu0 %v700
      %981 = vmatpush.msra.mxu0 %v699
      %982 = vmatpush.msra.mxu0 %v698
      %983 = vmatmul.f32.gmra.mxu0 %v625
      %v984 = vpop.f32.mrf.mxu0
      %v985 = vadd.f32 %v965, %v984
      %986 = vdwg.mxu0
      %987 = vmatpush.msra.mxu0 %v729
      %988 = vmatpush.msra.mxu0 %v728
      %989 = vmatpush.msra.mxu0 %v727
      %990 = vmatpush.msra.mxu0 %v726
      %991 = vmatpush.msra.mxu0 %v725
      %992 = vmatpush.msra.mxu0 %v724
      %993 = vmatpush.msra.mxu0 %v723
      %994 = vmatpush.msra.mxu0 %v722
      %995 = vmatpush.msra.mxu0 %v721
      %996 = vmatpush.msra.mxu0 %v720
      %997 = vmatpush.msra.mxu0 %v719
      %998 = vmatpush.msra.mxu0 %v718
      %999 = vmatpush.msra.mxu0 %v717
      %1000 = vmatpush.msra.mxu0 %v716
      %1001 = vmatpush.msra.mxu0 %v715
      %1002 = vmatpush.msra.mxu0 %v714
      %1003 = vmatmul.f32.gmra.mxu0 %v627
      %v1004 = vpop.f32.mrf.mxu0
      %v1005 = vadd.f32 %v985, %v1004
      %1006 = vdwg.mxu0
      %1007 = vmatpush.msra.mxu0 %v745
      %1008 = vmatpush.msra.mxu0 %v744
      %1009 = vmatpush.msra.mxu0 %v743
      %1010 = vmatpush.msra.mxu0 %v742
      %1011 = vmatpush.msra.mxu0 %v741
      %1012 = vmatpush.msra.mxu0 %v740
      %1013 = vmatpush.msra.mxu0 %v739
      %1014 = vmatpush.msra.mxu0 %v738
      %1015 = vmatpush.msra.mxu0 %v737
      %1016 = vmatpush.msra.mxu0 %v736
      %1017 = vmatpush.msra.mxu0 %v735
      %1018 = vmatpush.msra.mxu0 %v734
      %1019 = vmatpush.msra.mxu0 %v733
      %1020 = vmatpush.msra.mxu0 %v732
      %1021 = vmatpush.msra.mxu0 %v731
      %1022 = vmatpush.msra.mxu0 %v730
      %1023 = vmatmul.f32.gmra.mxu0 %v629
      %v1024 = vpop.f32.mrf.mxu0
      %v1025 = vadd.f32 %v1005, %v1024
      %1026 = vdwg.mxu0
      %1027 = vmatpush.msra.mxu0 %v761
      %1028 = vmatpush.msra.mxu0 %v760
      %1029 = vmatpush.msra.mxu0 %v759
      %1030 = vmatpush.msra.mxu0 %v758
      %1031 = vmatpush.msra.mxu0 %v757
      %1032 = vmatpush.msra.mxu0 %v756
      %1033 = vmatpush.msra.mxu0 %v755
      %1034 = vmatpush.msra.mxu0 %v754
      %1035 = vmatpush.msra.mxu0 %v753
      %1036 = vmatpush.msra.mxu0 %v752
      %1037 = vmatpush.msra.mxu0 %v751
      %1038 = vmatpush.msra.mxu0 %v750
      %1039 = vmatpush.msra.mxu0 %v749
      %1040 = vmatpush.msra.mxu0 %v748
      %1041 = vmatpush.msra.mxu0 %v747
      %1042 = vmatpush.msra.mxu0 %v746
      %1043 = vmatmul.f32.gmra.mxu0 %v631
      %v1044 = vpop.f32.mrf.mxu0
      %v1045 = vadd.f32 %v1025, %v1044
      %1046 = vdwg.mxu0
      %1047 = vmatpush.msra.mxu0 %v777
      %1048 = vmatpush.msra.mxu0 %v776
      %1049 = vmatpush.msra.mxu0 %v775
      %1050 = vmatpush.msra.mxu0 %v774
      %1051 = vmatpush.msra.mxu0 %v773
      %1052 = vmatpush.msra.mxu0 %v772
      %1053 = vmatpush.msra.mxu0 %v771
      %1054 = vmatpush.msra.mxu0 %v770
      %1055 = vmatpush.msra.mxu0 %v769
      %1056 = vmatpush.msra.mxu0 %v768
      %1057 = vmatpush.msra.mxu0 %v767
      %1058 = vmatpush.msra.mxu0 %v766
      %1059 = vmatpush.msra.mxu0 %v765
      %1060 = vmatpush.msra.mxu0 %v764
      %1061 = vmatpush.msra.mxu0 %v763
      %1062 = vmatpush.msra.mxu0 %v762
      %1063 = vmatmul.f32.gmra.mxu0 %v633
      %v1064 = vpop.f32.mrf.mxu0
      %v1065 = vadd.f32 %v1045, %v1064
      %1066 = vdwg.mxu0
      %1067 = vmatpush.msra.mxu0 %v793
      %1068 = vmatpush.msra.mxu0 %v792
      %1069 = vmatpush.msra.mxu0 %v791
      %1070 = vmatpush.msra.mxu0 %v790
      %1071 = vmatpush.msra.mxu0 %v789
      %1072 = vmatpush.msra.mxu0 %v788
      %1073 = vmatpush.msra.mxu0 %v787
      %1074 = vmatpush.msra.mxu0 %v786
      %1075 = vmatpush.msra.mxu0 %v785
      %1076 = vmatpush.msra.mxu0 %v784
      %1077 = vmatpush.msra.mxu0 %v783
      %1078 = vmatpush.msra.mxu0 %v782
      %1079 = vmatpush.msra.mxu0 %v781
      %1080 = vmatpush.msra.mxu0 %v780
      %1081 = vmatpush.msra.mxu0 %v779
      %1082 = vmatpush.msra.mxu0 %v778
      %1083 = vmatmul.f32.gmra.mxu0 %v635
      %v1084 = vpop.f32.mrf.mxu0
      %v1085 = vadd.f32 %v1065, %v1084
      %1086 = vdwg.mxu0
      %1087 = vmatpush.msra.mxu0 %v809
      %1088 = vmatpush.msra.mxu0 %v808
      %1089 = vmatpush.msra.mxu0 %v807
      %1090 = vmatpush.msra.mxu0 %v806
      %1091 = vmatpush.msra.mxu0 %v805
      %1092 = vmatpush.msra.mxu0 %v804
      %1093 = vmatpush.msra.mxu0 %v803
      %1094 = vmatpush.msra.mxu0 %v802
      %1095 = vmatpush.msra.mxu0 %v801
      %1096 = vmatpush.msra.mxu0 %v800
      %1097 = vmatpush.msra.mxu0 %v799
      %1098 = vmatpush.msra.mxu0 %v798
      %1099 = vmatpush.msra.mxu0 %v797
      %1100 = vmatpush.msra.mxu0 %v796
      %1101 = vmatpush.msra.mxu0 %v795
      %1102 = vmatpush.msra.mxu0 %v794
      %1103 = vmatmul.f32.gmra.mxu0 %v637
      %v1104 = vpop.f32.mrf.mxu0
      %v1105 = vadd.f32 %v1085, %v1104
      %1106 = vdwg.mxu0
      %1107 = vmatpush.msra.mxu0 %v825
      %1108 = vmatpush.msra.mxu0 %v824
      %1109 = vmatpush.msra.mxu0 %v823
      %1110 = vmatpush.msra.mxu0 %v822
      %1111 = vmatpush.msra.mxu0 %v821
      %1112 = vmatpush.msra.mxu0 %v820
      %1113 = vmatpush.msra.mxu0 %v819
      %1114 = vmatpush.msra.mxu0 %v818
      %1115 = vmatpush.msra.mxu0 %v817
      %1116 = vmatpush.msra.mxu0 %v816
      %1117 = vmatpush.msra.mxu0 %v815
      %1118 = vmatpush.msra.mxu0 %v814
      %1119 = vmatpush.msra.mxu0 %v813
      %1120 = vmatpush.msra.mxu0 %v812
      %1121 = vmatpush.msra.mxu0 %v811
      %1122 = vmatpush.msra.mxu0 %v810
      %1123 = vmatmul.f32.gmra.mxu0 %v639
      %v1124 = vpop.f32.mrf.mxu0
      %v1125 = vadd.f32 %v1105, %v1124
      %1126 = vdwg.mxu0
      %1127 = vmatpush.msra.mxu0 %v841
      %1128 = vmatpush.msra.mxu0 %v840
      %1129 = vmatpush.msra.mxu0 %v839
      %1130 = vmatpush.msra.mxu0 %v838
      %1131 = vmatpush.msra.mxu0 %v837
      %1132 = vmatpush.msra.mxu0 %v836
      %1133 = vmatpush.msra.mxu0 %v835
      %1134 = vmatpush.msra.mxu0 %v834
      %1135 = vmatpush.msra.mxu0 %v833
      %1136 = vmatpush.msra.mxu0 %v832
      %1137 = vmatpush.msra.mxu0 %v831
      %1138 = vmatpush.msra.mxu0 %v830
      %1139 = vmatpush.msra.mxu0 %v829
      %1140 = vmatpush.msra.mxu0 %v828
      %1141 = vmatpush.msra.mxu0 %v827
      %1142 = vmatpush.msra.mxu0 %v826
      %1143 = vmatmul.f32.gmra.mxu0 %v641
      %v1144 = vpop.f32.mrf.mxu0
      %v1145 = vadd.f32 %v1125, %v1144
      %1146 = vdwg.mxu0
      %1147 = vmatpush.msra.mxu0 %v857
      %1148 = vmatpush.msra.mxu0 %v856
      %1149 = vmatpush.msra.mxu0 %v855
      %1150 = vmatpush.msra.mxu0 %v854
      %1151 = vmatpush.msra.mxu0 %v853
      %1152 = vmatpush.msra.mxu0 %v852
      %1153 = vmatpush.msra.mxu0 %v851
      %1154 = vmatpush.msra.mxu0 %v850
      %1155 = vmatpush.msra.mxu0 %v849
      %1156 = vmatpush.msra.mxu0 %v848
      %1157 = vmatpush.msra.mxu0 %v847
      %1158 = vmatpush.msra.mxu0 %v846
      %1159 = vmatpush.msra.mxu0 %v845
      %1160 = vmatpush.msra.mxu0 %v844
      %1161 = vmatpush.msra.mxu0 %v843
      %1162 = vmatpush.msra.mxu0 %v842
      %1163 = vmatmul.f32.gmra.mxu0 %v643
      %v1164 = vpop.f32.mrf.mxu0
      %v1165 = vadd.f32 %v1145, %v1164
      %1166 = vdwg.mxu0
      %1167 = vmatpush.msra.mxu0 %v873
      %1168 = vmatpush.msra.mxu0 %v872
      %1169 = vmatpush.msra.mxu0 %v871
      %1170 = vmatpush.msra.mxu0 %v870
      %1171 = vmatpush.msra.mxu0 %v869
      %1172 = vmatpush.msra.mxu0 %v868
      %1173 = vmatpush.msra.mxu0 %v867
      %1174 = vmatpush.msra.mxu0 %v866
      %1175 = vmatpush.msra.mxu0 %v865
      %1176 = vmatpush.msra.mxu0 %v864
      %1177 = vmatpush.msra.mxu0 %v863
      %1178 = vmatpush.msra.mxu0 %v862
      %1179 = vmatpush.msra.mxu0 %v861
      %1180 = vmatpush.msra.mxu0 %v860
      %1181 = vmatpush.msra.mxu0 %v859
      %1182 = vmatpush.msra.mxu0 %v858
      %1183 = vmatmul.f32.gmra.mxu0 %v645
      %v1184 = vpop.f32.mrf.mxu0
      %v1185 = vadd.f32 %v1165, %v1184
      %1186 = vdwg.mxu0
      %1187 = vmatpush.msra.mxu0 %v889
      %1188 = vmatpush.msra.mxu0 %v888
      %1189 = vmatpush.msra.mxu0 %v887
      %1190 = vmatpush.msra.mxu0 %v886
      %1191 = vmatpush.msra.mxu0 %v885
      %1192 = vmatpush.msra.mxu0 %v884
      %1193 = vmatpush.msra.mxu0 %v883
      %1194 = vmatpush.msra.mxu0 %v882
      %1195 = vmatpush.msra.mxu0 %v881
      %1196 = vmatpush.msra.mxu0 %v880
      %1197 = vmatpush.msra.mxu0 %v879
      %1198 = vmatpush.msra.mxu0 %v878
      %1199 = vmatpush.msra.mxu0 %v877
      %1200 = vmatpush.msra.mxu0 %v876
      %1201 = vmatpush.msra.mxu0 %v875
      %1202 = vmatpush.msra.mxu0 %v874
      %1203 = vmatmul.f32.gmra.mxu0 %v647
      %v1204 = vpop.f32.mrf.mxu0
      %v1205 = vadd.f32 %v1185, %v1204
      %1206 = vdwg.mxu0
      %1207 = vmatpush.msra.mxu0 %v905
      %1208 = vmatpush.msra.mxu0 %v904
      %1209 = vmatpush.msra.mxu0 %v903
      %1210 = vmatpush.msra.mxu0 %v902
      %1211 = vmatpush.msra.mxu0 %v901
      %1212 = vmatpush.msra.mxu0 %v900
      %1213 = vmatpush.msra.mxu0 %v899
      %1214 = vmatpush.msra.mxu0 %v898
      %1215 = vmatpush.msra.mxu0 %v897
      %1216 = vmatpush.msra.mxu0 %v896
      %1217 = vmatpush.msra.mxu0 %v895
      %1218 = vmatpush.msra.mxu0 %v894
      %1219 = vmatpush.msra.mxu0 %v893
      %1220 = vmatpush.msra.mxu0 %v892
      %1221 = vmatpush.msra.mxu0 %v891
      %1222 = vmatpush.msra.mxu0 %v890
      %1223 = vmatmul.f32.gmra.mxu0 %v649
      %v1224 = vpop.f32.mrf.mxu0
      %v1225 = vadd.f32 %v1205, %v1224
      %1226 = vdwg.mxu0
      %vm1227 = vcmask 73728
      %1228 = vst.msk [vmem:[%s353] sm:$0x1] %vm1227, %v1225
      %p1229 = scmp.lt.s32.totalorder %s21, 1
      %s1230 = scalar_select %p1229, %s21, 1
      %s1231 = smul.addr %s1230, 2
      %s1232 = smul.addr %s1231, 8
      %s1233 = scalar_lea.vmem %s7, %s1232
      %p1234 = scmp.lt.s32.totalorder %s21, 1
      %s1235 = scalar_select %p1234, %s21, 1
      %s1236 = smul.addr %s1235, 2
      %s1237 = smul.addr %s1236, 8
      %s1238 = scalar_lea.vmem %s8, %s1237
      %p1239 = scmp.lt.s32.totalorder %s21, 1
      %s1240 = scalar_select %p1239, %s21, 1
      %s1241 = scalar_lea.vmem %s9, %s1240
      // Predicated region
      $region49: #{all_sequential_forward.1} parent=47 // pred_check
        %p1242 = pneg %p191
      $region50: #{all_sequential_forward.1} parent=47 // pred_check_branch
        %1244 = sbr.rel (%p1242) target = $region52
      $region51: #{all_sequential_forward.1} parent=47 // pred_region
        _
      $region52: #{all_sequential_forward.1} parent=47 // pred_fallthru
        _
      // Predicated region
      $region53: #{all_sequential_forward.1} parent=47 // pred_check
        %p1245 = pneg %p217
      $region54: #{all_sequential_forward.1} parent=47 // pred_check_branch
        %1247 = sbr.rel (%p1245) target = $region56
      $region55: #{all_sequential_forward.1} parent=47 // pred_region
        _
      $region56: #{all_sequential_forward.1} parent=47 // pred_fallthru
        _
      // Predicated region
      $region57: #{all_sequential_forward.1} parent=47 // pred_check
        %p1248 = pneg %p243
      $region58: #{all_sequential_forward.1} parent=47 // pred_check_branch
        %1250 = sbr.rel (%p1248) target = $region60
      $region59: #{all_sequential_forward.1} parent=47 // pred_region
        _
      $region60: #{all_sequential_forward.1} parent=47 // pred_fallthru
        _
    $region48: #{all_sequential_forward.1} parent=5 // pred_fallthru
      _
    %p1251 = scmp.le.s32.totalorder 2, %s16
    // Predicated region
    $region61: #{all_sequential_forward.1} parent=5 // pred_check
      %p1252 = pneg %p1251
    $region62: #{all_sequential_forward.1} parent=5 // pred_check_branch
      %1254 = sbr.rel (%p1252) target = $region64
    $region63: #{all_sequential_forward.1} parent=5 // pred_region
      %s1255 = ssub.s32 %s16, 2
      // Predicated region
      $region65: #{all_sequential_forward.1} parent=63 // pred_check
        %p1256 = pneg %p197
      $region66: #{all_sequential_forward.1} parent=63 // pred_check_branch
        %1258 = sbr.rel (%p1256) target = $region68
      $region67: #{all_sequential_forward.1} parent=63 // pred_region
        %p1259 = scmp.lt.s32.totalorder %s22, 1
        %s1260 = scalar_select %p1259, %s22, 1
        %s1261 = smul.addr %s1260, 2
        %s1262 = smul.addr %s1261, 8
        %s1263 = scalar_lea.vmem %s7, %s1262
      $region68: #{all_sequential_forward.1} parent=63 // pred_fallthru
        _
      // Predicated region
      $region69: #{all_sequential_forward.1} parent=63 // pred_check
        %p1264 = pneg %p223
      $region70: #{all_sequential_forward.1} parent=63 // pred_check_branch
        %1266 = sbr.rel (%p1264) target = $region72
      $region71: #{all_sequential_forward.1} parent=63 // pred_region
        %p1267 = scmp.lt.s32.totalorder %s22, 1
        %s1268 = scalar_select %p1267, %s22, 1
        %s1269 = smul.addr %s1268, 2
        %s1270 = smul.addr %s1269, 8
        %s1271 = scalar_lea.vmem %s8, %s1270
      $region72: #{all_sequential_forward.1} parent=63 // pred_fallthru
        _
      // Predicated region
      $region73: #{all_sequential_forward.1} parent=63 // pred_check
        %p1272 = pneg %p249
      $region74: #{all_sequential_forward.1} parent=63 // pred_check_branch
        %1274 = sbr.rel (%p1272) target = $region76
      $region75: #{all_sequential_forward.1} parent=63 // pred_region
        %p1275 = scmp.lt.s32.totalorder %s22, 1
        %s1276 = scalar_select %p1275, %s22, 1
        %s1277 = scalar_lea.vmem %s9, %s1276
      $region76: #{all_sequential_forward.1} parent=63 // pred_fallthru
        _
    $region64: #{all_sequential_forward.1} parent=5 // pred_fallthru
      _
  $region6: #{all_sequential_forward.1} parent=0 // loop_footer
    %s20 = sadd.s32 1, %s16
  $region7: #{all_sequential_forward.1} parent=0 // loop_footer_branch
    %15 = sbr.rel target = $region3
  $region8: #{all_sequential_forward.1} parent=0 // loop_exit
    _

</llo_original>
